<compile_context>
chip_gen: v7x
topology: tpu7x:2x2x1
jax: 0.10.0
libtpu: 0.0.40
codegen_flags: <defaults>
</compile_context>

<pallas_src>
import jax
import jax.numpy as jnp
from jax.experimental import pallas as pl
from jax.experimental.pallas import tpu as pltpu


def _silu(x):
    # x * sigmoid(x) == 0.5 * x * (1 + tanh(x/2)): one EUP push per vreg.
    return 0.5 * x * (1.0 + jnp.tanh(0.5 * x))


def _softplus(x):
    # numerically stable softplus (matches torch.nn.Softplus, beta=1);
    # plain log (not log1p) for lowering safety -- argument is in (1, 2].
    return jnp.maximum(x, 0.0) + jnp.log(1.0 + jnp.exp(-jnp.abs(x)))


def fc_xas_kernel(x_ref,
                  w1_ref, c1_ref,
                  w2_ref, c2_ref,
                  w3_ref, b3_ref,
                  o_ref):
    """Fused 3-layer MLP forward for one tile of batch rows.

    BN is pre-folded into (w1, c1) / (w2, c2) on the host, so each hidden
    layer is dot(bf16, bf16 -> f32) + bias + SiLU; the last layer is
    dot + bias + softplus written to a lane-dense (128-wide) bf16 tile.
    """
    # in-kernel cast of the f32 x stream (saves a standalone XLA convert pass)
    x = x_ref[...].astype(jnp.bfloat16)

    # layer 0: (Linear . BN) -> SiLU     (f32 accumulate + f32 epilogue)
    h = jnp.dot(x, w1_ref[...], preferred_element_type=jnp.float32) + c1_ref[...]
    h = _silu(h)

    # layer 1: (Linear . BN) -> SiLU
    h = jnp.dot(h.astype(w2_ref.dtype), w2_ref[...],
                preferred_element_type=jnp.float32) + c2_ref[...]
    h = _silu(h)

    # layer 2 (last): Linear -> Softplus
    h = jnp.dot(h.astype(w3_ref.dtype), w3_ref[...],
                preferred_element_type=jnp.float32) + b3_ref[...]
    o_ref[...] = _softplus(h).astype(o_ref.dtype)


def fc_xas_forward(x, params, *, tile_m=1024):
    """Run the fused FC_XAS forward pass with a Pallas kernel.

    x:      [N, D_in] float32
    params: dict with w1,b1,s1,t1,w2,b2,s2,t2,w3,b3 (vectors shaped [1, W])
    """
    N, D_in = x.shape
    D_out = params["w3"].shape[1]

    # --- host-side precompute: fold BN into weights/biases, cast to bf16 ---
    w1 = (params["w1"] * params["s1"]).astype(jnp.bfloat16)
    c1 = params["b1"] * params["s1"] + params["t1"]          # f32
    w2 = (params["w2"] * params["s2"]).astype(jnp.bfloat16)
    c2 = params["b2"] * params["s2"] + params["t2"]          # f32

    # pad the output feature dim to a multiple of 128 lanes (unmasked stores)
    D_out_pad = max(((D_out + 127) // 128) * 128, 128)
    w3 = jnp.zeros((params["w3"].shape[0], D_out_pad), jnp.float32)
    w3 = w3.at[:, :D_out].set(params["w3"]).astype(jnp.bfloat16)
    b3 = jnp.zeros((1, D_out_pad), jnp.float32).at[:, :D_out].set(params["b3"])

    H1 = w1.shape[1]
    H2 = w2.shape[1]

    # --- batch tiling (no host-side padding of x) ---
    if N <= tile_m:
        tile_m = N                      # single block == full batch (always legal)
    else:
        # keep tiles >= 256 rows (amortize ~0.35us/step) but cap so the grid
        # has ~8 steps -> >= 3-4 per v7x TensorCore for pipeline overlap;
        # multiples of 16 rows for bf16 sublane pairing.
        cap = max(256, ((pl.cdiv(N, 8) + 15) // 16) * 16)
        tile_m = min(((tile_m + 15) // 16) * 16, cap)
    n_tiles = pl.cdiv(N, tile_m)

    full = lambda shape: pl.BlockSpec(shape, lambda i: (0, 0))

    flops = 2 * N * (D_in * H1 + H1 * H2 + H2 * D_out_pad)
    transcendentals = N * (H1 + H2 + D_out_pad)
    bytes_accessed = (N * D_in * 4 + N * D_out_pad * 2
                      + 2 * (w1.size + w2.size + w3.size)
                      + 4 * (c1.size + c2.size + b3.size))

    out = pl.pallas_call(
        fc_xas_kernel,
        out_shape=jax.ShapeDtypeStruct((N, D_out_pad), jnp.bfloat16),
        grid_spec=pl.GridSpec(
            grid=(n_tiles,),
            in_specs=[
                pl.BlockSpec((tile_m, D_in), lambda i: (i, 0)),   # x tile (f32)
                full((D_in, H1)), full((1, H1)),
                full((H1, H2)), full((1, H2)),
                full((H2, D_out_pad)), full((1, D_out_pad)),
            ],
            out_specs=pl.BlockSpec((tile_m, D_out_pad), lambda i: (i, 0)),
        ),
        compiler_params=pltpu.CompilerParams(
            dimension_semantics=("parallel",)),
        cost_estimate=pl.CostEstimate(flops=flops,
                                      transcendentals=transcendentals,
                                      bytes_accessed=bytes_accessed),
    )(x, w1, c1, w2, c2, w3, b3)

    # slice off the lane padding; return f32 like the PyTorch module
    return out[:, :D_out].astype(jnp.float32)


def init_params(key, d_in, h1, h2, d_out, eps=1e-5):
    """Deterministic synthetic init (PyTorch-Linear-style uniform), f32."""
    ks = jax.random.split(key, 16)

    def linear(kw, kb, fan_in, fan_out):
        bound = 1.0 / jnp.sqrt(fan_in)
        w = jax.random.uniform(kw, (fan_in, fan_out), jnp.float32, -bound, bound)
        b = jax.random.uniform(kb, (1, fan_out), jnp.float32, -bound, bound)
        return w, b

    def bn(kg, kb, km, kv, width):
        gamma = jax.random.uniform(kg, (1, width), jnp.float32, 0.5, 1.5)
        beta = jax.random.uniform(kb, (1, width), jnp.float32, -0.5, 0.5)
        mean = jax.random.uniform(km, (1, width), jnp.float32, -0.1, 0.1)
        var = jax.random.uniform(kv, (1, width), jnp.float32, 0.5, 1.5)
        scale = gamma / jnp.sqrt(var + eps)
        shift = beta - mean * scale
        return scale, shift

    w1, b1 = linear(ks[0], ks[1], d_in, h1)
    s1, t1 = bn(ks[2], ks[3], ks[4], ks[5], h1)
    w2, b2 = linear(ks[6], ks[7], h1, h2)
    s2, t2 = bn(ks[8], ks[9], ks[10], ks[11], h2)
    w3, b3 = linear(ks[12], ks[13], h2, d_out)

    return dict(w1=w1, b1=b1, s1=s1, t1=t1,
                w2=w2, b2=b2, s2=s2, t2=t2,
                w3=w3, b3=b3)


def reference_forward(x, p):
    """Pure-JAX f32 reference (same eval-mode semantics)."""
    h = x @ p["w1"] + p["b1"]
    h = h * p["s1"] + p["t1"]
    h = h * jax.nn.sigmoid(h)
    h = h @ p["w2"] + p["b2"]
    h = h * p["s2"] + p["t2"]
    h = h * jax.nn.sigmoid(h)
    h = h @ p["w3"] + p["b3"]
    return jax.nn.softplus(h)


if __name__ == "__main__":
    # FC_XAS(widths=[32, 32], input_dim=16, output_dim=8)
    D_IN, H1, H2, D_OUT = 16, 32, 32, 8
    N = 4096  # -> 8 grid steps of 512 rows: 4 steps per v7x TensorCore

    key = jax.random.PRNGKey(0)
    kx, kp = jax.random.split(key)
    x = jax.random.normal(kx, (N, D_IN), dtype=jnp.float32)
    params = init_params(kp, D_IN, H1, H2, D_OUT)

    out = fc_xas_forward(x, params)
    out = jax.block_until_ready(out)

    ref = reference_forward(x, params)
    assert out.shape == (N, D_OUT)
    # bf16 matmul operands + bf16 output store -> relaxed tolerance vs f32 ref
    assert jnp.allclose(out, ref, atol=3e-2, rtol=3e-2), "mismatch vs reference"

    print("KERNEL_OK")
</pallas_src>

<mosaic_0001>
module attributes {stable_mosaic.version = 11 : i64} {
  func.func @fc_xas_kernel(%arg0: i32, %arg1: memref<512x16xf32, #tpu.memory_space<vmem>>, %arg2: memref<16x32xbf16, #tpu.memory_space<vmem>>, %arg3: memref<1x32xf32, #tpu.memory_space<vmem>>, %arg4: memref<32x32xbf16, #tpu.memory_space<vmem>>, %arg5: memref<1x32xf32, #tpu.memory_space<vmem>>, %arg6: memref<32x128xbf16, #tpu.memory_space<vmem>>, %arg7: memref<1x128xf32, #tpu.memory_space<vmem>>, %arg8: memref<512x128xbf16, #tpu.memory_space<vmem>>) attributes {dimension_semantics = [#tpu.dimension_semantics<parallel>], iteration_bounds = array<i64: 8>, scalar_prefetch = 0 : i64, scratch_operands = 0 : i64, tpu.core_type = #tpu.core_type<tc>, window_params = [{transform_indices = @transform_0, window_bounds = array<i64: 512, 16>}, {pipeline_mode = #tpu.pipeline_mode<synchronous>, transform_indices = @transform_1, window_bounds = array<i64: 16, 32>}, {pipeline_mode = #tpu.pipeline_mode<synchronous>, transform_indices = @transform_2, window_bounds = array<i64: 1, 32>}, {pipeline_mode = #tpu.pipeline_mode<synchronous>, transform_indices = @transform_3, window_bounds = array<i64: 32, 32>}, {pipeline_mode = #tpu.pipeline_mode<synchronous>, transform_indices = @transform_4, window_bounds = array<i64: 1, 32>}, {pipeline_mode = #tpu.pipeline_mode<synchronous>, transform_indices = @transform_5, window_bounds = array<i64: 32, 128>}, {pipeline_mode = #tpu.pipeline_mode<synchronous>, transform_indices = @transform_6, window_bounds = array<i64: 1, 128>}, {transform_indices = @transform_7, window_bounds = array<i64: 512, 128>}]} {
    %c0 = arith.constant 0 : index
    %c0_0 = arith.constant 0 : index
    %0 = vector.load %arg1[%c0, %c0_0] : memref<512x16xf32, #tpu.memory_space<vmem>>, vector<512x16xf32>
    %1 = arith.truncf %0 : vector<512x16xf32> to vector<512x16xbf16>
    %c0_1 = arith.constant 0 : index
    %c0_2 = arith.constant 0 : index
    %2 = vector.load %arg2[%c0_1, %c0_2] : memref<16x32xbf16, #tpu.memory_space<vmem>>, vector<16x32xbf16>
    %cst = arith.constant dense<0.000000e+00> : vector<512x32xf32>
    %3 = tpu.matmul %1, %2, %cst {dimension_numbers = #tpu.dot_dimension_numbers<[1], [0], [0], [1], [0, 0, 1, 1], [], []>} : vector<512x16xbf16>, vector<16x32xbf16>, vector<512x32xf32> -> vector<512x32xf32>
    %c0_3 = arith.constant 0 : index
    %c0_4 = arith.constant 0 : index
    %4 = vector.load %arg3[%c0_3, %c0_4] : memref<1x32xf32, #tpu.memory_space<vmem>>, vector<1x32xf32>
    %5 = vector.broadcast %4 : vector<1x32xf32> to vector<512x32xf32>
    %6 = arith.addf %3, %5 : vector<512x32xf32>
    %cst_5 = arith.constant 5.000000e-01 : f32
    %7 = vector.broadcast %cst_5 : f32 to vector<512x32xf32>
    %8 = arith.mulf %7, %6 : vector<512x32xf32>
    %cst_6 = arith.constant 5.000000e-01 : f32
    %9 = vector.broadcast %cst_6 : f32 to vector<512x32xf32>
    %10 = arith.mulf %9, %6 : vector<512x32xf32>
    %11 = math.tanh %10 : vector<512x32xf32>
    %cst_7 = arith.constant 1.000000e+00 : f32
    %12 = vector.broadcast %cst_7 : f32 to vector<512x32xf32>
    %13 = arith.addf %12, %11 : vector<512x32xf32>
    %14 = arith.mulf %8, %13 : vector<512x32xf32>
    %15 = arith.truncf %14 : vector<512x32xf32> to vector<512x32xbf16>
    %c0_8 = arith.constant 0 : index
    %c0_9 = arith.constant 0 : index
    %16 = vector.load %arg4[%c0_8, %c0_9] : memref<32x32xbf16, #tpu.memory_space<vmem>>, vector<32x32xbf16>
    %cst_10 = arith.constant dense<0.000000e+00> : vector<512x32xf32>
    %17 = tpu.matmul %15, %16, %cst_10 {dimension_numbers = #tpu.dot_dimension_numbers<[1], [0], [0], [1], [0, 0, 1, 1], [], []>} : vector<512x32xbf16>, vector<32x32xbf16>, vector<512x32xf32> -> vector<512x32xf32>
    %c0_11 = arith.constant 0 : index
    %c0_12 = arith.constant 0 : index
    %18 = vector.load %arg5[%c0_11, %c0_12] : memref<1x32xf32, #tpu.memory_space<vmem>>, vector<1x32xf32>
    %19 = vector.broadcast %18 : vector<1x32xf32> to vector<512x32xf32>
    %20 = arith.addf %17, %19 : vector<512x32xf32>
    %cst_13 = arith.constant 5.000000e-01 : f32
    %21 = vector.broadcast %cst_13 : f32 to vector<512x32xf32>
    %22 = arith.mulf %21, %20 : vector<512x32xf32>
    %cst_14 = arith.constant 5.000000e-01 : f32
    %23 = vector.broadcast %cst_14 : f32 to vector<512x32xf32>
    %24 = arith.mulf %23, %20 : vector<512x32xf32>
    %25 = math.tanh %24 : vector<512x32xf32>
    %cst_15 = arith.constant 1.000000e+00 : f32
    %26 = vector.broadcast %cst_15 : f32 to vector<512x32xf32>
    %27 = arith.addf %26, %25 : vector<512x32xf32>
    %28 = arith.mulf %22, %27 : vector<512x32xf32>
    %29 = arith.truncf %28 : vector<512x32xf32> to vector<512x32xbf16>
    %c0_16 = arith.constant 0 : index
    %c0_17 = arith.constant 0 : index
    %30 = vector.load %arg6[%c0_16, %c0_17] : memref<32x128xbf16, #tpu.memory_space<vmem>>, vector<32x128xbf16>
    %cst_18 = arith.constant dense<0.000000e+00> : vector<512x128xf32>
    %31 = tpu.matmul %29, %30, %cst_18 {dimension_numbers = #tpu.dot_dimension_numbers<[1], [0], [0], [1], [0, 0, 1, 1], [], []>} : vector<512x32xbf16>, vector<32x128xbf16>, vector<512x128xf32> -> vector<512x128xf32>
    %c0_19 = arith.constant 0 : index
    %c0_20 = arith.constant 0 : index
    %32 = vector.load %arg7[%c0_19, %c0_20] : memref<1x128xf32, #tpu.memory_space<vmem>>, vector<1x128xf32>
    %33 = vector.broadcast %32 : vector<1x128xf32> to vector<512x128xf32>
    %34 = arith.addf %31, %33 : vector<512x128xf32>
    %cst_21 = arith.constant 0.000000e+00 : f32
    %35 = vector.broadcast %cst_21 : f32 to vector<512x128xf32>
    %36 = arith.maximumf %34, %35 : vector<512x128xf32>
    %37 = math.absf %34 : vector<512x128xf32>
    %cst_22 = arith.constant 0.000000e+00 : f32
    %38 = vector.broadcast %cst_22 : f32 to vector<512x128xf32>
    %39 = arith.subf %38, %37 : vector<512x128xf32>
    %40 = math.exp %39 : vector<512x128xf32>
    %cst_23 = arith.constant 1.000000e+00 : f32
    %41 = vector.broadcast %cst_23 : f32 to vector<512x128xf32>
    %42 = arith.addf %41, %40 : vector<512x128xf32>
    %43 = math.log %42 : vector<512x128xf32>
    %44 = arith.addf %36, %43 : vector<512x128xf32>
    %45 = arith.truncf %44 : vector<512x128xf32> to vector<512x128xbf16>
    %c0_24 = arith.constant 0 : index
    %c0_25 = arith.constant 0 : index
    %46 = vector.load %arg8[%c0_24, %c0_25] : memref<512x128xbf16, #tpu.memory_space<vmem>>, vector<512x128xbf16>
    tpu.vector_store %arg8[%c0_24, %c0_25], %45 {strides = array<i32>} : memref<512x128xbf16, #tpu.memory_space<vmem>>, vector<512x128xbf16>,
    return
  }
  func.func @transform_0(%arg0: i32) -> (i32, i32) {
    %c0_i32 = arith.constant 0 : i32
    %c0_i32_0 = arith.constant 0 : i32
    return %arg0, %c0_i32 : i32, i32
  }
  func.func @transform_1(%arg0: i32) -> (i32, i32) {
    %c0_i32 = arith.constant 0 : i32
    %c0_i32_0 = arith.constant 0 : i32
    %c0_i32_1 = arith.constant 0 : i32
    return %c0_i32, %c0_i32_0 : i32, i32
  }
  func.func @transform_2(%arg0: i32) -> (i32, i32) {
    %c0_i32 = arith.constant 0 : i32
    %c0_i32_0 = arith.constant 0 : i32
    %c0_i32_1 = arith.constant 0 : i32
    return %c0_i32, %c0_i32_0 : i32, i32
  }
  func.func @transform_3(%arg0: i32) -> (i32, i32) {
    %c0_i32 = arith.constant 0 : i32
    %c0_i32_0 = arith.constant 0 : i32
    %c0_i32_1 = arith.constant 0 : i32
    return %c0_i32, %c0_i32_0 : i32, i32
  }
  func.func @transform_4(%arg0: i32) -> (i32, i32) {
    %c0_i32 = arith.constant 0 : i32
    %c0_i32_0 = arith.constant 0 : i32
    %c0_i32_1 = arith.constant 0 : i32
    return %c0_i32, %c0_i32_0 : i32, i32
  }
  func.func @transform_5(%arg0: i32) -> (i32, i32) {
    %c0_i32 = arith.constant 0 : i32
    %c0_i32_0 = arith.constant 0 : i32
    %c0_i32_1 = arith.constant 0 : i32
    return %c0_i32, %c0_i32_0 : i32, i32
  }
  func.func @transform_6(%arg0: i32) -> (i32, i32) {
    %c0_i32 = arith.constant 0 : i32
    %c0_i32_0 = arith.constant 0 : i32
    %c0_i32_1 = arith.constant 0 : i32
    return %c0_i32, %c0_i32_0 : i32, i32
  }
  func.func @transform_7(%arg0: i32) -> (i32, i32) {
    %c0_i32 = arith.constant 0 : i32
    %c0_i32_0 = arith.constant 0 : i32
    return %arg0, %c0_i32 : i32, i32
  }
}

</mosaic_0001>

<llo_original>
// kernel: tpu_custom_call.1
$region0: #{tpu_custom_call.1}
  #allocation0 [shape = 'u32[]', space=smem, size = 0x4, offset = 0x4, fixed_abs, tag = 'smem constant byte address 0x4 - core index']
  #allocation1 [shape = 'u32[144,128]{1,0:T(1,128)}', space=vmem, size = 0x12000, scoped, tag = 'internal scratch']
  %s0 = inlined_call_operand.vmem [shape: f32[4096,16], index: 0, kind: input, shape index: {}]
  %s1 = inlined_call_operand.vmem [shape: bf16[16,32], index: 1, kind: input, shape index: {}]
  %s2 = inlined_call_operand.vmem [shape: f32[1,32], index: 2, kind: input, shape index: {}]
  %s3 = inlined_call_operand.vmem [shape: bf16[32,32], index: 3, kind: input, shape index: {}]
  %s4 = inlined_call_operand.vmem [shape: f32[1,32], index: 4, kind: input, shape index: {}]
  %s5 = inlined_call_operand.vmem [shape: bf16[32,128], index: 5, kind: input, shape index: {}]
  %s6 = inlined_call_operand.vmem [shape: f32[1,128], index: 6, kind: input, shape index: {}]
  %s7 = inlined_call_operand.hbm [shape: bf16[4096,128], index: 7, kind: output, shape index: {}]
  %s8 = sld [smem:[#allocation0]]
  $region61: #{tpu_custom_call.1} parent=0
    _
  %s10 = ssub.s32 1, %s8
  %s11 = scalar_select 0, %s10, %s8
  $region1: #{tpu_custom_call.1} parent=0
    #allocation2 [shape = 'u8[262144]{0}', space=vmem, size = 0x40000, scoped, tag = 'output window, operand 0']
    #allocation3 [shape = 's32[2]{0}', space=sflag, size = 0x8, scoped, tag = 'scoped memory for tpu_custom_call.1']
    %12 = vsyncpa [#allocation3], 0
    %s13 = scalar_lea.sflag [#allocation3], 1
    %14 = vsyncpa %s13, 0
    loop: start=0, step=1, limit=10
    $region2: #{tpu_custom_call.1} parent=1 // loop_pre_header
      _
    $region3: #{tpu_custom_call.1} parent=1 // loop_header
      %s16 = sphi 0, %s20
      %p17 = scmp.ge.s32.totalorder %s16, 10
      %s26 = sphi 0, %s28
      %s29 = sphi 0, %s26
      %s30 = sphi 0, %s29
      %s46 = sphi 0, %s30
      %s50 = sphi 0, %s50
      %s52 = sphi 0, %s50
      %s53 = sphi 0, %s52
      %s67 = sphi 0, %s53
      %s71 = sphi 0, %s71
      %s73 = sphi 0, %s71
      %s74 = sphi 0, %s73
      %s88 = sphi 0, %s74
      %s92 = sphi 0, %s92
      %s94 = sphi 0, %s92
      %s95 = sphi 0, %s94
      %s109 = sphi 0, %s95
      %s113 = sphi 0, %s113
      %s115 = sphi 0, %s113
      %s116 = sphi 0, %s115
      %s130 = sphi 0, %s116
      %s134 = sphi 0, %s134
      %s136 = sphi 0, %s134
      %s137 = sphi 0, %s136
      %s151 = sphi 0, %s137
      %s155 = sphi 0, %s155
      %s157 = sphi 0, %s155
      %s158 = sphi 0, %s157
      %s172 = sphi 0, %s158
      %s178 = sphi 0, %s180
      %s181 = sphi 0, %s178
      %s182 = sphi 0, %s181
      %s198 = sphi 0, %s182
    $region4: #{tpu_custom_call.1} parent=1 // loop_header_branch
      %19 = sbr.rel (%p17) target = $region8
    $region5: #{tpu_custom_call.1} parent=1 // loop_body
      %s21 = ssub.s32 %s16, 1
      %s22 = ssub.s32 %s16, 2
      %s23 = sadd.s32 %s16, 1
      %s24 = ssub.s32 %s16, %s23
      %p25 = scmp.eq.s32.totalorder %s24, 0
      %s27 = sadd.s32 %s26, 1
      %s28 = scalar_select %p25, %s26, %s27
      %p31 = pneg %p25
      %p32 = scmp.eq.s32.totalorder %s16, 7
      %p33 = por %p31, %p32
      %p34 = scmp.ne.s32.totalorder %s26, %s29
      %p35 = scmp.eq.s32.totalorder %s16, 0
      %p36 = por %p34, %p35
      %p37 = scmp.ne.s32.totalorder %s26, %s29
      %p38 = scmp.eq.s32.totalorder %s21, 7
      %p39 = por %p37, %p38
      %p40 = scmp.ne.s32.totalorder %s29, %s30
      %p41 = scmp.eq.s32.totalorder %s21, 0
      %p42 = por %p40, %p41
      %p43 = scmp.ne.s32.totalorder %s29, %s30
      %p44 = scmp.eq.s32.totalorder %s22, 7
      %p45 = por %p43, %p44
      %p47 = scmp.ne.s32.totalorder %s30, %s46
      %p48 = scmp.eq.s32.totalorder %s22, 0
      %p49 = por %p47, %p48
      %s51 = sadd.s32 %s50, 1
      %p54 = scmp.eq.s32.totalorder %s16, 7
      %p55 = scmp.ne.s32.totalorder %s50, %s52
      %p56 = scmp.eq.s32.totalorder %s16, 0
      %p57 = por %p55, %p56
      %p58 = scmp.ne.s32.totalorder %s50, %s52
      %p59 = scmp.eq.s32.totalorder %s21, 7
      %p60 = por %p58, %p59
      %p61 = scmp.ne.s32.totalorder %s52, %s53
      %p62 = scmp.eq.s32.totalorder %s21, 0
      %p63 = por %p61, %p62
      %p64 = scmp.ne.s32.totalorder %s52, %s53
      %p65 = scmp.eq.s32.totalorder %s22, 7
      %p66 = por %p64, %p65
      %p68 = scmp.ne.s32.totalorder %s53, %s67
      %p69 = scmp.eq.s32.totalorder %s22, 0
      %p70 = por %p68, %p69
      %s72 = sadd.s32 %s71, 1
      %p75 = scmp.eq.s32.totalorder %s16, 7
      %p76 = scmp.ne.s32.totalorder %s71, %s73
      %p77 = scmp.eq.s32.totalorder %s16, 0
      %p78 = por %p76, %p77
      %p79 = scmp.ne.s32.totalorder %s71, %s73
      %p80 = scmp.eq.s32.totalorder %s21, 7
      %p81 = por %p79, %p80
      %p82 = scmp.ne.s32.totalorder %s73, %s74
      %p83 = scmp.eq.s32.totalorder %s21, 0
      %p84 = por %p82, %p83
      %p85 = scmp.ne.s32.totalorder %s73, %s74
      %p86 = scmp.eq.s32.totalorder %s22, 7
      %p87 = por %p85, %p86
      %p89 = scmp.ne.s32.totalorder %s74, %s88
      %p90 = scmp.eq.s32.totalorder %s22, 0
      %p91 = por %p89, %p90
      %s93 = sadd.s32 %s92, 1
      %p96 = scmp.eq.s32.totalorder %s16, 7
      %p97 = scmp.ne.s32.totalorder %s92, %s94
      %p98 = scmp.eq.s32.totalorder %s16, 0
      %p99 = por %p97, %p98
      %p100 = scmp.ne.s32.totalorder %s92, %s94
      %p101 = scmp.eq.s32.totalorder %s21, 7
      %p102 = por %p100, %p101
      %p103 = scmp.ne.s32.totalorder %s94, %s95
      %p104 = scmp.eq.s32.totalorder %s21, 0
      %p105 = por %p103, %p104
      %p106 = scmp.ne.s32.totalorder %s94, %s95
      %p107 = scmp.eq.s32.totalorder %s22, 7
      %p108 = por %p106, %p107
      %p110 = scmp.ne.s32.totalorder %s95, %s109
      %p111 = scmp.eq.s32.totalorder %s22, 0
      %p112 = por %p110, %p111
      %s114 = sadd.s32 %s113, 1
      %p117 = scmp.eq.s32.totalorder %s16, 7
      %p118 = scmp.ne.s32.totalorder %s113, %s115
      %p119 = scmp.eq.s32.totalorder %s16, 0
      %p120 = por %p118, %p119
      %p121 = scmp.ne.s32.totalorder %s113, %s115
      %p122 = scmp.eq.s32.totalorder %s21, 7
      %p123 = por %p121, %p122
      %p124 = scmp.ne.s32.totalorder %s115, %s116
      %p125 = scmp.eq.s32.totalorder %s21, 0
      %p126 = por %p124, %p125
      %p127 = scmp.ne.s32.totalorder %s115, %s116
      %p128 = scmp.eq.s32.totalorder %s22, 7
      %p129 = por %p127, %p128
      %p131 = scmp.ne.s32.totalorder %s116, %s130
      %p132 = scmp.eq.s32.totalorder %s22, 0
      %p133 = por %p131, %p132
      %s135 = sadd.s32 %s134, 1
      %p138 = scmp.eq.s32.totalorder %s16, 7
      %p139 = scmp.ne.s32.totalorder %s134, %s136
      %p140 = scmp.eq.s32.totalorder %s16, 0
      %p141 = por %p139, %p140
      %p142 = scmp.ne.s32.totalorder %s134, %s136
      %p143 = scmp.eq.s32.totalorder %s21, 7
      %p144 = por %p142, %p143
      %p145 = scmp.ne.s32.totalorder %s136, %s137
      %p146 = scmp.eq.s32.totalorder %s21, 0
      %p147 = por %p145, %p146
      %p148 = scmp.ne.s32.totalorder %s136, %s137
      %p149 = scmp.eq.s32.totalorder %s22, 7
      %p150 = por %p148, %p149
      %p152 = scmp.ne.s32.totalorder %s137, %s151
      %p153 = scmp.eq.s32.totalorder %s22, 0
      %p154 = por %p152, %p153
      %s156 = sadd.s32 %s155, 1
      %p159 = scmp.eq.s32.totalorder %s16, 7
      %p160 = scmp.ne.s32.totalorder %s155, %s157
      %p161 = scmp.eq.s32.totalorder %s16, 0
      %p162 = por %p160, %p161
      %p163 = scmp.ne.s32.totalorder %s155, %s157
      %p164 = scmp.eq.s32.totalorder %s21, 7
      %p165 = por %p163, %p164
      %p166 = scmp.ne.s32.totalorder %s157, %s158
      %p167 = scmp.eq.s32.totalorder %s21, 0
      %p168 = por %p166, %p167
      %p169 = scmp.ne.s32.totalorder %s157, %s158
      %p170 = scmp.eq.s32.totalorder %s22, 7
      %p171 = por %p169, %p170
      %p173 = scmp.ne.s32.totalorder %s158, %s172
      %p174 = scmp.eq.s32.totalorder %s22, 0
      %p175 = por %p173, %p174
      %s176 = ssub.s32 %s16, %s23
      %p177 = scmp.eq.s32.totalorder %s176, 0
      %s179 = sadd.s32 %s178, 1
      %s180 = scalar_select %p177, %s178, %s179
      %p183 = pneg %p177
      %p184 = scmp.eq.s32.totalorder %s16, 7
      %p185 = por %p183, %p184
      %p186 = scmp.ne.s32.totalorder %s178, %s181
      %p187 = scmp.eq.s32.totalorder %s16, 0
      %p188 = por %p186, %p187
      %p189 = scmp.ne.s32.totalorder %s178, %s181
      %p190 = scmp.eq.s32.totalorder %s21, 7
      %p191 = por %p189, %p190
      %p192 = scmp.ne.s32.totalorder %s181, %s182
      %p193 = scmp.eq.s32.totalorder %s21, 0
      %p194 = por %p192, %p193
      %p195 = scmp.ne.s32.totalorder %s181, %s182
      %p196 = scmp.eq.s32.totalorder %s22, 7
      %p197 = por %p195, %p196
      %p199 = scmp.ne.s32.totalorder %s182, %s198
      %p200 = scmp.eq.s32.totalorder %s22, 0
      %p201 = por %p199, %p200
      %p202 = scmp.le.s32.totalorder 1, %s16
      %p203 = scmp.lt.s32.totalorder %s16, 9
      %p204 = pnand %p202, %p203
      %p205 = pneg %p204
      // Predicated region
      $region9: #{tpu_custom_call.1} parent=5 // pred_check
        _
      $region10: #{tpu_custom_call.1} parent=5 // pred_check_branch
        %207 = sbr.rel (%p204) target = $region12
      $region11: #{tpu_custom_call.1} parent=5 // pred_region
        %s208 = ssub.s32 %s16, 1
        // Predicated region
        $region13: #{tpu_custom_call.1} parent=11 // pred_check
          %p209 = pneg %p63
        $region14: #{tpu_custom_call.1} parent=11 // pred_check_branch
          %211 = sbr.rel (%p209) target = $region16
        $region15: #{tpu_custom_call.1} parent=11 // pred_region
          _
        $region16: #{tpu_custom_call.1} parent=11 // pred_fallthru
          _
        // Predicated region
        $region17: #{tpu_custom_call.1} parent=11 // pred_check
          %p212 = pneg %p84
        $region18: #{tpu_custom_call.1} parent=11 // pred_check_branch
          %214 = sbr.rel (%p212) target = $region20
        $region19: #{tpu_custom_call.1} parent=11 // pred_region
          _
        $region20: #{tpu_custom_call.1} parent=11 // pred_fallthru
          _
        // Predicated region
        $region21: #{tpu_custom_call.1} parent=11 // pred_check
          %p215 = pneg %p105
        $region22: #{tpu_custom_call.1} parent=11 // pred_check_branch
          %217 = sbr.rel (%p215) target = $region24
        $region23: #{tpu_custom_call.1} parent=11 // pred_region
          _
        $region24: #{tpu_custom_call.1} parent=11 // pred_fallthru
          _
        // Predicated region
        $region25: #{tpu_custom_call.1} parent=11 // pred_check
          %p218 = pneg %p126
        $region26: #{tpu_custom_call.1} parent=11 // pred_check_branch
          %220 = sbr.rel (%p218) target = $region28
        $region27: #{tpu_custom_call.1} parent=11 // pred_region
          _
        $region28: #{tpu_custom_call.1} parent=11 // pred_fallthru
          _
        // Predicated region
        $region29: #{tpu_custom_call.1} parent=11 // pred_check
          %p221 = pneg %p147
        $region30: #{tpu_custom_call.1} parent=11 // pred_check_branch
          %223 = sbr.rel (%p221) target = $region32
        $region31: #{tpu_custom_call.1} parent=11 // pred_region
          _
        $region32: #{tpu_custom_call.1} parent=11 // pred_fallthru
          _
        // Predicated region
        $region33: #{tpu_custom_call.1} parent=11 // pred_check
          %p224 = pneg %p168
        $region34: #{tpu_custom_call.1} parent=11 // pred_check_branch
          %226 = sbr.rel (%p224) target = $region36
        $region35: #{tpu_custom_call.1} parent=11 // pred_region
          _
        $region36: #{tpu_custom_call.1} parent=11 // pred_fallthru
          _
      $region12: #{tpu_custom_call.1} parent=5 // pred_fallthru
        _
      %p227 = scmp.lt.s32.totalorder %s16, 8
      // Predicated region
      $region37: #{tpu_custom_call.1} parent=5 // pred_check
        %p228 = pneg %p227
      $region38: #{tpu_custom_call.1} parent=5 // pred_check_branch
        %230 = sbr.rel (%p228) target = $region40
      $region39: #{tpu_custom_call.1} parent=5 // pred_region
        // Predicated region
        $region41: #{tpu_custom_call.1} parent=39 // pred_check
          %p231 = pneg %p36
        $region42: #{tpu_custom_call.1} parent=39 // pred_check_branch
          %233 = sbr.rel (%p231) target = $region44
        $region43: #{tpu_custom_call.1} parent=39 // pred_region
          %s234 = smul.u32 64, %s16
          %p235 = scmp.lt.s32.totalorder %s234, 511
          %s236 = scalar_select %p235, %s234, 511
          %s237 = smul.addr %s236, 8
          %s238 = scalar_lea.vmem %s0, %s237
          %s239 = smul.u32 64, %s16
        $region44: #{tpu_custom_call.1} parent=39 // pred_fallthru
          _
      $region40: #{tpu_custom_call.1} parent=5 // pred_fallthru
        _
      %p240 = scmp.le.s32.totalorder 1, %s16
      %p241 = scmp.lt.s32.totalorder %s16, 9
      %p242 = pnand %p240, %p241
      %p243 = pneg %p242
      // Predicated region
      $region45: #{tpu_custom_call.1} parent=5 // pred_check
        _
      $region46: #{tpu_custom_call.1} parent=5 // pred_check_branch
        %245 = sbr.rel (%p242) target = $region48
      $region47: #{tpu_custom_call.1} parent=5 // pred_region
        %s246 = ssub.s32 %s16, 1
        %s247 = smul.u32 64, %s21
        %p248 = scmp.lt.s32.totalorder %s247, 511
        %s249 = scalar_select %p248, %s247, 511
        %s250 = smul.addr %s249, 8
        %s251 = scalar_lea.vmem %s0, %s250
        %p252 = pneg %p42
        %p253 = pneg %p39
        %p254 = pneg %p63
        %p255 = pneg %p60
        %p256 = pneg %p84
        %p257 = pneg %p81
        %p258 = pneg %p105
        %p259 = pneg %p102
        %p260 = pneg %p126
        %p261 = pneg %p123
        %p262 = pneg %p147
        %p263 = pneg %p144
        %p264 = pneg %p168
        %p265 = pneg %p165
        %p266 = pneg %p194
        %p267 = pneg %p191
        %s268 = sand.u32 %s181, 1
        %s269 = scalar_lea.sflag [#allocation3], %s268
        %s270 = sand.u32 %s181, 1
        %s271 = smul.addr %s270, 256
        %s272 = scalar_lea.vmem [#allocation2], %s271
        %s273 = smul.u32 64, %s21
        %p274 = scmp.lt.s32.totalorder %s273, 511
        %s275 = scalar_select %p274, %s273, 511
        %s276 = smul.addr %s275, 8
        %s277 = scalar_lea.vmem %s0, %s276
        %s278 = smul.u32 64, %s21
        %s279 = smul.u32 64, %s21
        %v281 = vld [vmem:[%s277] sm:$0xff]
        %v282 = vld [vmem:[%s277 + $0x8] sm:$0xff]
        %v283 = vld [vmem:[%s277 + $0x10] sm:$0xff]
        %v284 = vld [vmem:[%s277 + $0x18] sm:$0xff]
        %v285 = vld [vmem:[%s277 + $0x20] sm:$0xff]
        %v286 = vld [vmem:[%s277 + $0x28] sm:$0xff]
        %v287 = vld [vmem:[%s277 + $0x30] sm:$0xff]
        %v288 = vld [vmem:[%s277 + $0x38] sm:$0xff]
        %v289 = vld [vmem:[%s277 + $0x40] sm:$0xff]
        %v290 = vld [vmem:[%s277 + $0x48] sm:$0xff]
        %v291 = vld [vmem:[%s277 + $0x50] sm:$0xff]
        %v292 = vld [vmem:[%s277 + $0x58] sm:$0xff]
        %v293 = vld [vmem:[%s277 + $0x60] sm:$0xff]
        %v294 = vld [vmem:[%s277 + $0x68] sm:$0xff]
        %v295 = vld [vmem:[%s277 + $0x70] sm:$0xff]
        %v296 = vld [vmem:[%s277 + $0x78] sm:$0xff]
        %v297 = vld [vmem:[%s277 + $0x80] sm:$0xff]
        %v298 = vld [vmem:[%s277 + $0x88] sm:$0xff]
        %v299 = vld [vmem:[%s277 + $0x90] sm:$0xff]
        %v300 = vld [vmem:[%s277 + $0x98] sm:$0xff]
        %v301 = vld [vmem:[%s277 + $0xa0] sm:$0xff]
        %v302 = vld [vmem:[%s277 + $0xa8] sm:$0xff]
        %v303 = vld [vmem:[%s277 + $0xb0] sm:$0xff]
        %v304 = vld [vmem:[%s277 + $0xb8] sm:$0xff]
        %v305 = vld [vmem:[%s277 + $0xc0] sm:$0xff]
        %v306 = vld [vmem:[%s277 + $0xc8] sm:$0xff]
        %v307 = vld [vmem:[%s277 + $0xd0] sm:$0xff]
        %v308 = vld [vmem:[%s277 + $0xd8] sm:$0xff]
        %v309 = vld [vmem:[%s277 + $0xe0] sm:$0xff]
        %v310 = vld [vmem:[%s277 + $0xe8] sm:$0xff]
        %v311 = vld [vmem:[%s277 + $0xf0] sm:$0xff]
        %v312 = vld [vmem:[%s277 + $0xf8] sm:$0xff]
        %v313 = vld [vmem:[%s277 + $0x100] sm:$0xff]
        %v314 = vld [vmem:[%s277 + $0x108] sm:$0xff]
        %v315 = vld [vmem:[%s277 + $0x110] sm:$0xff]
        %v316 = vld [vmem:[%s277 + $0x118] sm:$0xff]
        %v317 = vld [vmem:[%s277 + $0x120] sm:$0xff]
        %v318 = vld [vmem:[%s277 + $0x128] sm:$0xff]
        %v319 = vld [vmem:[%s277 + $0x130] sm:$0xff]
        %v320 = vld [vmem:[%s277 + $0x138] sm:$0xff]
        %v321 = vld [vmem:[%s277 + $0x140] sm:$0xff]
        %v322 = vld [vmem:[%s277 + $0x148] sm:$0xff]
        %v323 = vld [vmem:[%s277 + $0x150] sm:$0xff]
        %v324 = vld [vmem:[%s277 + $0x158] sm:$0xff]
        %v325 = vld [vmem:[%s277 + $0x160] sm:$0xff]
        %v326 = vld [vmem:[%s277 + $0x168] sm:$0xff]
        %v327 = vld [vmem:[%s277 + $0x170] sm:$0xff]
        %v328 = vld [vmem:[%s277 + $0x178] sm:$0xff]
        %v329 = vld [vmem:[%s277 + $0x180] sm:$0xff]
        %v330 = vld [vmem:[%s277 + $0x188] sm:$0xff]
        %v331 = vld [vmem:[%s277 + $0x190] sm:$0xff]
        %v332 = vld [vmem:[%s277 + $0x198] sm:$0xff]
        %v333 = vld [vmem:[%s277 + $0x1a0] sm:$0xff]
        %v334 = vld [vmem:[%s277 + $0x1a8] sm:$0xff]
        %v335 = vld [vmem:[%s277 + $0x1b0] sm:$0xff]
        %v336 = vld [vmem:[%s277 + $0x1b8] sm:$0xff]
        %v337 = vld [vmem:[%s277 + $0x1c0] sm:$0xff]
        %v338 = vld [vmem:[%s277 + $0x1c8] sm:$0xff]
        %v339 = vld [vmem:[%s277 + $0x1d0] sm:$0xff]
        %v340 = vld [vmem:[%s277 + $0x1d8] sm:$0xff]
        %v341 = vld [vmem:[%s277 + $0x1e0] sm:$0xff]
        %v342 = vld [vmem:[%s277 + $0x1e8] sm:$0xff]
        %v343 = vld [vmem:[%s277 + $0x1f0] sm:$0xff]
        %v344 = vld [vmem:[%s277 + $0x1f8] sm:$0xff]
        %v345 = vpack.c.bf16 %v282, %v281
        %v346 = vpack.c.bf16 %v284, %v283
        %v347 = vpack.c.bf16 %v286, %v285
        %v348 = vpack.c.bf16 %v288, %v287
        %v349 = vpack.c.bf16 %v290, %v289
        %v350 = vpack.c.bf16 %v292, %v291
        %v351 = vpack.c.bf16 %v294, %v293
        %v352 = vpack.c.bf16 %v296, %v295
        %v353 = vpack.c.bf16 %v298, %v297
        %v354 = vpack.c.bf16 %v300, %v299
        %v355 = vpack.c.bf16 %v302, %v301
        %v356 = vpack.c.bf16 %v304, %v303
        %v357 = vpack.c.bf16 %v306, %v305
        %v358 = vpack.c.bf16 %v308, %v307
        %v359 = vpack.c.bf16 %v310, %v309
        %v360 = vpack.c.bf16 %v312, %v311
        %v361 = vpack.c.bf16 %v314, %v313
        %v362 = vpack.c.bf16 %v316, %v315
        %v363 = vpack.c.bf16 %v318, %v317
        %v364 = vpack.c.bf16 %v320, %v319
        %v365 = vpack.c.bf16 %v322, %v321
        %v366 = vpack.c.bf16 %v324, %v323
        %v367 = vpack.c.bf16 %v326, %v325
        %v368 = vpack.c.bf16 %v328, %v327
        %v369 = vpack.c.bf16 %v330, %v329
        %v370 = vpack.c.bf16 %v332, %v331
        %v371 = vpack.c.bf16 %v334, %v333
        %v372 = vpack.c.bf16 %v336, %v335
        %v373 = vpack.c.bf16 %v338, %v337
        %v374 = vpack.c.bf16 %v340, %v339
        %v375 = vpack.c.bf16 %v342, %v341
        %v376 = vpack.c.bf16 %v344, %v343
        %v377 = vld [vmem:[%s1] sm:$0xf]
        %v378 = vld [vmem:[%s1 + $0x4] sm:$0xf]
        %v379 = vld [vmem:[%s2] sm:$0x1]
        %v381 = vlaneseq
        %v382 = vshrl.u32 %v381, 7
        %v383 = vsub.s32 0, %v382
        %v384 = vrot.slane %v379, %v383
        %v388 = vunpack.c.l.b16 %v377
        %v389 = vunpack.c.l.b16 %v378
        %v390 = vpack.c.b16 %v389, %v388
        %vm392 = vcmask 130048
        %v394 = vsel %vm392, %v345, 0
        %v397 = vsel %vm392, %v346, 0
        %v400 = vsel %vm392, %v347, 0
        %v403 = vsel %vm392, %v348, 0
        %v406 = vsel %vm392, %v349, 0
        %v409 = vsel %vm392, %v350, 0
        %v412 = vsel %vm392, %v351, 0
        %v415 = vsel %vm392, %v352, 0
        %v418 = vsel %vm392, %v353, 0
        %v421 = vsel %vm392, %v354, 0
        %v424 = vsel %vm392, %v355, 0
        %v427 = vsel %vm392, %v356, 0
        %v430 = vsel %vm392, %v357, 0
        %v433 = vsel %vm392, %v358, 0
        %v436 = vsel %vm392, %v359, 0
        %v439 = vsel %vm392, %v360, 0
        %v442 = vsel %vm392, %v361, 0
        %v445 = vsel %vm392, %v362, 0
        %v448 = vsel %vm392, %v363, 0
        %v451 = vsel %vm392, %v364, 0
        %v454 = vsel %vm392, %v365, 0
        %v457 = vsel %vm392, %v366, 0
        %v460 = vsel %vm392, %v367, 0
        %v463 = vsel %vm392, %v368, 0
        %v466 = vsel %vm392, %v369, 0
        %v469 = vsel %vm392, %v370, 0
        %v472 = vsel %vm392, %v371, 0
        %v475 = vsel %vm392, %v372, 0
        %v478 = vsel %vm392, %v373, 0
        %v481 = vsel %vm392, %v374, 0
        %v484 = vsel %vm392, %v375, 0
        %v487 = vsel %vm392, %v376, 0
        %489 = vmatprep.subr.bf16.mxu0 0
        %490 = vmatpush1.bf16.msra.mxu0 %v390
        %491 = vmatprep.subr.bf16.mxu0 0
        %492 = vmatpush1.bf16.msra.mxu0 0
        %493 = vmatprep.subr.bf16.mxu0 0
        %494 = vmatpush1.bf16.msra.mxu0 0
        %495 = vmatprep.subr.bf16.mxu0 0
        %496 = vmatpush1.bf16.msra.mxu0 0
        %497 = vmatprep.subr.bf16.mxu0 0
        %498 = vmatpush1.bf16.msra.mxu0 0
        %499 = vmatprep.subr.bf16.mxu0 0
        %500 = vmatpush1.bf16.msra.mxu0 0
        %501 = vmatprep.subr.bf16.mxu0 0
        %502 = vmatpush1.bf16.msra.mxu0 0
        %503 = vmatprep.subr.bf16.mxu0 0
        %504 = vmatpush1.bf16.msra.mxu0 0
        %505 = vmatprep.subr.bf16.mxu0 0
        %506 = vmatpush1.bf16.msra.mxu0 0
        %507 = vmatprep.subr.bf16.mxu0 0
        %508 = vmatpush1.bf16.msra.mxu0 0
        %509 = vmatprep.subr.bf16.mxu0 0
        %510 = vmatpush1.bf16.msra.mxu0 0
        %511 = vmatprep.subr.bf16.mxu0 0
        %512 = vmatpush1.bf16.msra.mxu0 0
        %513 = vmatprep.subr.bf16.mxu0 0
        %514 = vmatpush1.bf16.msra.mxu0 0
        %515 = vmatprep.subr.bf16.mxu0 0
        %516 = vmatpush1.bf16.msra.mxu0 0
        %517 = vmatprep.subr.bf16.mxu0 0
        %518 = vmatpush1.bf16.msra.mxu0 0
        %519 = vmatprep.subr.bf16.mxu0 0
        %520 = vmatpush1.bf16.msra.mxu0 0
        %521 = vmatprep.mubr.bf16.mxu0 0
        %522 = vmatmul.mubr.bf16.gmra.mrb[0].mxu0 %v394
        %v523 = vpop.f32.mrb[0].mxu0
        %v524 = vadd.f32 %v384, %v523
        %v525 = vpop.f32.mrb[0].mxu0
        %v526 = vpop.f32.mrb[0].mxu0
        %v527 = vadd.f32 %v384, %v526
        %v528 = vpop.f32.mrb[0].mxu0
        %529 = vmatprep.mubr.bf16.mxu0 0
        %530 = vmatmul.mubr.bf16.gmra.mrb[0].mxu0 %v397
        %v531 = vpop.f32.mrb[0].mxu0
        %v532 = vadd.f32 %v384, %v531
        %v533 = vpop.f32.mrb[0].mxu0
        %v534 = vpop.f32.mrb[0].mxu0
        %v535 = vadd.f32 %v384, %v534
        %v536 = vpop.f32.mrb[0].mxu0
        %537 = vmatprep.mubr.bf16.mxu0 0
        %538 = vmatmul.mubr.bf16.gmra.mrb[0].mxu0 %v400
        %v539 = vpop.f32.mrb[0].mxu0
        %v540 = vadd.f32 %v384, %v539
        %v541 = vpop.f32.mrb[0].mxu0
        %v542 = vpop.f32.mrb[0].mxu0
        %v543 = vadd.f32 %v384, %v542
        %v544 = vpop.f32.mrb[0].mxu0
        %545 = vmatprep.mubr.bf16.mxu0 0
        %546 = vmatmul.mubr.bf16.gmra.mrb[0].mxu0 %v403
        %v547 = vpop.f32.mrb[0].mxu0
        %v548 = vadd.f32 %v384, %v547
        %v549 = vpop.f32.mrb[0].mxu0
        %v550 = vpop.f32.mrb[0].mxu0
        %v551 = vadd.f32 %v384, %v550
        %v552 = vpop.f32.mrb[0].mxu0
        %553 = vmatprep.mubr.bf16.mxu0 0
        %554 = vmatmul.mubr.bf16.gmra.mrb[0].mxu0 %v406
        %v555 = vpop.f32.mrb[0].mxu0
        %v556 = vadd.f32 %v384, %v555
        %v557 = vpop.f32.mrb[0].mxu0
        %v558 = vpop.f32.mrb[0].mxu0
        %v559 = vadd.f32 %v384, %v558
        %v560 = vpop.f32.mrb[0].mxu0
        %561 = vmatprep.mubr.bf16.mxu0 0
        %562 = vmatmul.mubr.bf16.gmra.mrb[0].mxu0 %v409
        %v563 = vpop.f32.mrb[0].mxu0
        %v564 = vadd.f32 %v384, %v563
        %v565 = vpop.f32.mrb[0].mxu0
        %v566 = vpop.f32.mrb[0].mxu0
        %v567 = vadd.f32 %v384, %v566
        %v568 = vpop.f32.mrb[0].mxu0
        %569 = vmatprep.mubr.bf16.mxu0 0
        %570 = vmatmul.mubr.bf16.gmra.mrb[0].mxu0 %v412
        %v571 = vpop.f32.mrb[0].mxu0
        %v572 = vadd.f32 %v384, %v571
        %v573 = vpop.f32.mrb[0].mxu0
        %v574 = vpop.f32.mrb[0].mxu0
        %v575 = vadd.f32 %v384, %v574
        %v576 = vpop.f32.mrb[0].mxu0
        %577 = vmatprep.mubr.bf16.mxu0 0
        %578 = vmatmul.mubr.bf16.gmra.mrb[0].mxu0 %v415
        %v579 = vpop.f32.mrb[0].mxu0
        %v580 = vadd.f32 %v384, %v579
        %v581 = vpop.f32.mrb[0].mxu0
        %v582 = vpop.f32.mrb[0].mxu0
        %v583 = vadd.f32 %v384, %v582
        %v584 = vpop.f32.mrb[0].mxu0
        %585 = vmatprep.mubr.bf16.mxu0 0
        %586 = vmatmul.mubr.bf16.gmra.mrb[0].mxu0 %v418
        %v587 = vpop.f32.mrb[0].mxu0
        %v588 = vadd.f32 %v384, %v587
        %v589 = vpop.f32.mrb[0].mxu0
        %v590 = vpop.f32.mrb[0].mxu0
        %v591 = vadd.f32 %v384, %v590
        %v592 = vpop.f32.mrb[0].mxu0
        %593 = vmatprep.mubr.bf16.mxu0 0
        %594 = vmatmul.mubr.bf16.gmra.mrb[0].mxu0 %v421
        %v595 = vpop.f32.mrb[0].mxu0
        %v596 = vadd.f32 %v384, %v595
        %v597 = vpop.f32.mrb[0].mxu0
        %v598 = vpop.f32.mrb[0].mxu0
        %v599 = vadd.f32 %v384, %v598
        %v600 = vpop.f32.mrb[0].mxu0
        %601 = vmatprep.mubr.bf16.mxu0 0
        %602 = vmatmul.mubr.bf16.gmra.mrb[0].mxu0 %v424
        %v603 = vpop.f32.mrb[0].mxu0
        %v604 = vadd.f32 %v384, %v603
        %v605 = vpop.f32.mrb[0].mxu0
        %v606 = vpop.f32.mrb[0].mxu0
        %v607 = vadd.f32 %v384, %v606
        %v608 = vpop.f32.mrb[0].mxu0
        %609 = vmatprep.mubr.bf16.mxu0 0
        %610 = vmatmul.mubr.bf16.gmra.mrb[0].mxu0 %v427
        %v611 = vpop.f32.mrb[0].mxu0
        %v612 = vadd.f32 %v384, %v611
        %v613 = vpop.f32.mrb[0].mxu0
        %v614 = vpop.f32.mrb[0].mxu0
        %v615 = vadd.f32 %v384, %v614
        %v616 = vpop.f32.mrb[0].mxu0
        %617 = vmatprep.mubr.bf16.mxu0 0
        %618 = vmatmul.mubr.bf16.gmra.mrb[0].mxu0 %v430
        %v619 = vpop.f32.mrb[0].mxu0
        %v620 = vadd.f32 %v384, %v619
        %v621 = vpop.f32.mrb[0].mxu0
        %v622 = vpop.f32.mrb[0].mxu0
        %v623 = vadd.f32 %v384, %v622
        %v624 = vpop.f32.mrb[0].mxu0
        %625 = vmatprep.mubr.bf16.mxu0 0
        %626 = vmatmul.mubr.bf16.gmra.mrb[0].mxu0 %v433
        %v627 = vpop.f32.mrb[0].mxu0
        %v628 = vadd.f32 %v384, %v627
        %v629 = vpop.f32.mrb[0].mxu0
        %v630 = vpop.f32.mrb[0].mxu0
        %v631 = vadd.f32 %v384, %v630
        %v632 = vpop.f32.mrb[0].mxu0
        %633 = vmatprep.mubr.bf16.mxu0 0
        %634 = vmatmul.mubr.bf16.gmra.mrb[0].mxu0 %v436
        %v635 = vpop.f32.mrb[0].mxu0
        %v636 = vadd.f32 %v384, %v635
        %v637 = vpop.f32.mrb[0].mxu0
        %v638 = vpop.f32.mrb[0].mxu0
        %v639 = vadd.f32 %v384, %v638
        %v640 = vpop.f32.mrb[0].mxu0
        %641 = vmatprep.mubr.bf16.mxu0 0
        %642 = vmatmul.mubr.bf16.gmra.mrb[0].mxu0 %v439
        %v643 = vpop.f32.mrb[0].mxu0
        %v644 = vadd.f32 %v384, %v643
        %v645 = vpop.f32.mrb[0].mxu0
        %v646 = vpop.f32.mrb[0].mxu0
        %v647 = vadd.f32 %v384, %v646
        %v648 = vpop.f32.mrb[0].mxu0
        %649 = vmatprep.mubr.bf16.mxu0 0
        %650 = vmatmul.mubr.bf16.gmra.mrb[0].mxu0 %v442
        %v651 = vpop.f32.mrb[0].mxu0
        %v652 = vadd.f32 %v384, %v651
        %v653 = vpop.f32.mrb[0].mxu0
        %v654 = vpop.f32.mrb[0].mxu0
        %v655 = vadd.f32 %v384, %v654
        %v656 = vpop.f32.mrb[0].mxu0
        %657 = vmatprep.mubr.bf16.mxu0 0
        %658 = vmatmul.mubr.bf16.gmra.mrb[0].mxu0 %v445
        %v659 = vpop.f32.mrb[0].mxu0
        %v660 = vadd.f32 %v384, %v659
        %v661 = vpop.f32.mrb[0].mxu0
        %v662 = vpop.f32.mrb[0].mxu0
        %v663 = vadd.f32 %v384, %v662
        %v664 = vpop.f32.mrb[0].mxu0
        %665 = vmatprep.mubr.bf16.mxu0 0
        %666 = vmatmul.mubr.bf16.gmra.mrb[0].mxu0 %v448
        %v667 = vpop.f32.mrb[0].mxu0
        %v668 = vadd.f32 %v384, %v667
        %v669 = vpop.f32.mrb[0].mxu0
        %v670 = vpop.f32.mrb[0].mxu0
        %v671 = vadd.f32 %v384, %v670
        %v672 = vpop.f32.mrb[0].mxu0
        %673 = vmatprep.mubr.bf16.mxu0 0
        %674 = vmatmul.mubr.bf16.gmra.mrb[0].mxu0 %v451
        %v675 = vpop.f32.mrb[0].mxu0
        %v676 = vadd.f32 %v384, %v675
        %v677 = vpop.f32.mrb[0].mxu0
        %v678 = vpop.f32.mrb[0].mxu0
        %v679 = vadd.f32 %v384, %v678
        %v680 = vpop.f32.mrb[0].mxu0
        %681 = vmatprep.mubr.bf16.mxu0 0
        %682 = vmatmul.mubr.bf16.gmra.mrb[0].mxu0 %v454
        %v683 = vpop.f32.mrb[0].mxu0
        %v684 = vadd.f32 %v384, %v683
        %v685 = vpop.f32.mrb[0].mxu0
        %v686 = vpop.f32.mrb[0].mxu0
        %v687 = vadd.f32 %v384, %v686
        %v688 = vpop.f32.mrb[0].mxu0
        %689 = vmatprep.mubr.bf16.mxu0 0
        %690 = vmatmul.mubr.bf16.gmra.mrb[0].mxu0 %v457
        %v691 = vpop.f32.mrb[0].mxu0
        %v692 = vadd.f32 %v384, %v691
        %v693 = vpop.f32.mrb[0].mxu0
        %v694 = vpop.f32.mrb[0].mxu0
        %v695 = vadd.f32 %v384, %v694
        %v696 = vpop.f32.mrb[0].mxu0
        %697 = vmatprep.mubr.bf16.mxu0 0
        %698 = vmatmul.mubr.bf16.gmra.mrb[0].mxu0 %v460
        %v699 = vpop.f32.mrb[0].mxu0
        %v700 = vadd.f32 %v384, %v699
        %v701 = vpop.f32.mrb[0].mxu0
        %v702 = vpop.f32.mrb[0].mxu0
        %v703 = vadd.f32 %v384, %v702
        %v704 = vpop.f32.mrb[0].mxu0
        %705 = vmatprep.mubr.bf16.mxu0 0
        %706 = vmatmul.mubr.bf16.gmra.mrb[0].mxu0 %v463
        %v707 = vpop.f32.mrb[0].mxu0
        %v708 = vadd.f32 %v384, %v707
        %v709 = vpop.f32.mrb[0].mxu0
        %v710 = vpop.f32.mrb[0].mxu0
        %v711 = vadd.f32 %v384, %v710
        %v712 = vpop.f32.mrb[0].mxu0
        %713 = vmatprep.mubr.bf16.mxu0 0
        %714 = vmatmul.mubr.bf16.gmra.mrb[0].mxu0 %v466
        %v715 = vpop.f32.mrb[0].mxu0
        %v716 = vadd.f32 %v384, %v715
        %v717 = vpop.f32.mrb[0].mxu0
        %v718 = vpop.f32.mrb[0].mxu0
        %v719 = vadd.f32 %v384, %v718
        %v720 = vpop.f32.mrb[0].mxu0
        %721 = vmatprep.mubr.bf16.mxu0 0
        %722 = vmatmul.mubr.bf16.gmra.mrb[0].mxu0 %v469
        %v723 = vpop.f32.mrb[0].mxu0
        %v724 = vadd.f32 %v384, %v723
        %v725 = vpop.f32.mrb[0].mxu0
        %v726 = vpop.f32.mrb[0].mxu0
        %v727 = vadd.f32 %v384, %v726
        %v728 = vpop.f32.mrb[0].mxu0
        %729 = vmatprep.mubr.bf16.mxu0 0
        %730 = vmatmul.mubr.bf16.gmra.mrb[0].mxu0 %v472
        %v731 = vpop.f32.mrb[0].mxu0
        %v732 = vadd.f32 %v384, %v731
        %v733 = vpop.f32.mrb[0].mxu0
        %v734 = vpop.f32.mrb[0].mxu0
        %v735 = vadd.f32 %v384, %v734
        %v736 = vpop.f32.mrb[0].mxu0
        %737 = vmatprep.mubr.bf16.mxu0 0
        %738 = vmatmul.mubr.bf16.gmra.mrb[0].mxu0 %v475
        %v739 = vpop.f32.mrb[0].mxu0
        %v740 = vadd.f32 %v384, %v739
        %v741 = vpop.f32.mrb[0].mxu0
        %v742 = vpop.f32.mrb[0].mxu0
        %v743 = vadd.f32 %v384, %v742
        %v744 = vpop.f32.mrb[0].mxu0
        %745 = vmatprep.mubr.bf16.mxu0 0
        %746 = vmatmul.mubr.bf16.gmra.mrb[0].mxu0 %v478
        %v747 = vpop.f32.mrb[0].mxu0
        %v748 = vadd.f32 %v384, %v747
        %v749 = vpop.f32.mrb[0].mxu0
        %v750 = vpop.f32.mrb[0].mxu0
        %v751 = vadd.f32 %v384, %v750
        %v752 = vpop.f32.mrb[0].mxu0
        %753 = vmatprep.mubr.bf16.mxu0 0
        %754 = vmatmul.mubr.bf16.gmra.mrb[0].mxu0 %v481
        %v755 = vpop.f32.mrb[0].mxu0
        %v756 = vadd.f32 %v384, %v755
        %v757 = vpop.f32.mrb[0].mxu0
        %v758 = vpop.f32.mrb[0].mxu0
        %v759 = vadd.f32 %v384, %v758
        %v760 = vpop.f32.mrb[0].mxu0
        %761 = vmatprep.mubr.bf16.mxu0 0
        %762 = vmatmul.mubr.bf16.gmra.mrb[0].mxu0 %v484
        %v763 = vpop.f32.mrb[0].mxu0
        %v764 = vadd.f32 %v384, %v763
        %v765 = vpop.f32.mrb[0].mxu0
        %v766 = vpop.f32.mrb[0].mxu0
        %v767 = vadd.f32 %v384, %v766
        %v768 = vpop.f32.mrb[0].mxu0
        %769 = vmatprep.mubr.bf16.mxu0 0
        %770 = vmatmul.mubr.bf16.gmra.mrb[0].mxu0 %v487
        %v771 = vpop.f32.mrb[0].mxu0
        %v772 = vadd.f32 %v384, %v771
        %v773 = vpop.f32.mrb[0].mxu0
        %v774 = vpop.f32.mrb[0].mxu0
        %v775 = vadd.f32 %v384, %v774
        %v776 = vpop.f32.mrb[0].mxu0
        %777 = vdwg.mxu0
        %v778 = vmul.f32 %v524, 0.5
        %v779 = vmul.f32 %v527, 0.5
        %v780 = vmul.f32 %v532, 0.5
        %v781 = vmul.f32 %v535, 0.5
        %v782 = vmul.f32 %v540, 0.5
        %v783 = vmul.f32 %v543, 0.5
        %v784 = vmul.f32 %v548, 0.5
        %v785 = vmul.f32 %v551, 0.5
        %v786 = vmul.f32 %v556, 0.5
        %v787 = vmul.f32 %v559, 0.5
        %v788 = vmul.f32 %v564, 0.5
        %v789 = vmul.f32 %v567, 0.5
        %v790 = vmul.f32 %v572, 0.5
        %v791 = vmul.f32 %v575, 0.5
        %v792 = vmul.f32 %v580, 0.5
        %v793 = vmul.f32 %v583, 0.5
        %v794 = vmul.f32 %v588, 0.5
        %v795 = vmul.f32 %v591, 0.5
        %v796 = vmul.f32 %v596, 0.5
        %v797 = vmul.f32 %v599, 0.5
        %v798 = vmul.f32 %v604, 0.5
        %v799 = vmul.f32 %v607, 0.5
        %v800 = vmul.f32 %v612, 0.5
        %v801 = vmul.f32 %v615, 0.5
        %v802 = vmul.f32 %v620, 0.5
        %v803 = vmul.f32 %v623, 0.5
        %v804 = vmul.f32 %v628, 0.5
        %v805 = vmul.f32 %v631, 0.5
        %v806 = vmul.f32 %v636, 0.5
        %v807 = vmul.f32 %v639, 0.5
        %v808 = vmul.f32 %v644, 0.5
        %v809 = vmul.f32 %v647, 0.5
        %v810 = vmul.f32 %v652, 0.5
        %v811 = vmul.f32 %v655, 0.5
        %v812 = vmul.f32 %v660, 0.5
        %v813 = vmul.f32 %v663, 0.5
        %v814 = vmul.f32 %v668, 0.5
        %v815 = vmul.f32 %v671, 0.5
        %v816 = vmul.f32 %v676, 0.5
        %v817 = vmul.f32 %v679, 0.5
        %v818 = vmul.f32 %v684, 0.5
        %v819 = vmul.f32 %v687, 0.5
        %v820 = vmul.f32 %v692, 0.5
        %v821 = vmul.f32 %v695, 0.5
        %v822 = vmul.f32 %v700, 0.5
        %v823 = vmul.f32 %v703, 0.5
        %v824 = vmul.f32 %v708, 0.5
        %v825 = vmul.f32 %v711, 0.5
        %v826 = vmul.f32 %v716, 0.5
        %v827 = vmul.f32 %v719, 0.5
        %v828 = vmul.f32 %v724, 0.5
        %v829 = vmul.f32 %v727, 0.5
        %v830 = vmul.f32 %v732, 0.5
        %v831 = vmul.f32 %v735, 0.5
        %v832 = vmul.f32 %v740, 0.5
        %v833 = vmul.f32 %v743, 0.5
        %v834 = vmul.f32 %v748, 0.5
        %v835 = vmul.f32 %v751, 0.5
        %v836 = vmul.f32 %v756, 0.5
        %v837 = vmul.f32 %v759, 0.5
        %v838 = vmul.f32 %v764, 0.5
        %v839 = vmul.f32 %v767, 0.5
        %v840 = vmul.f32 %v772, 0.5
        %v841 = vmul.f32 %v775, 0.5
        %v842 = vtanh.pop %v778
        %v843 = vtanh.pop %v779
        %v844 = vtanh.pop %v780
        %v845 = vtanh.pop %v781
        %v846 = vtanh.pop %v782
        %v847 = vtanh.pop %v783
        %v848 = vtanh.pop %v784
        %v849 = vtanh.pop %v785
        %v850 = vtanh.pop %v786
        %v851 = vtanh.pop %v787
        %v852 = vtanh.pop %v788
        %v853 = vtanh.pop %v789
        %v854 = vtanh.pop %v790
        %v855 = vtanh.pop %v791
        %v856 = vtanh.pop %v792
        %v857 = vtanh.pop %v793
        %v858 = vtanh.pop %v794
        %v859 = vtanh.pop %v795
        %v860 = vtanh.pop %v796
        %v861 = vtanh.pop %v797
        %v862 = vtanh.pop %v798
        %v863 = vtanh.pop %v799
        %v864 = vtanh.pop %v800
        %v865 = vtanh.pop %v801
        %v866 = vtanh.pop %v802
        %v867 = vtanh.pop %v803
        %v868 = vtanh.pop %v804
        %v869 = vtanh.pop %v805
        %v870 = vtanh.pop %v806
        %v871 = vtanh.pop %v807
        %v872 = vtanh.pop %v808
        %v873 = vtanh.pop %v809
        %v874 = vtanh.pop %v810
        %v875 = vtanh.pop %v811
        %v876 = vtanh.pop %v812
        %v877 = vtanh.pop %v813
        %v878 = vtanh.pop %v814
        %v879 = vtanh.pop %v815
        %v880 = vtanh.pop %v816
        %v881 = vtanh.pop %v817
        %v882 = vtanh.pop %v818
        %v883 = vtanh.pop %v819
        %v884 = vtanh.pop %v820
        %v885 = vtanh.pop %v821
        %v886 = vtanh.pop %v822
        %v887 = vtanh.pop %v823
        %v888 = vtanh.pop %v824
        %v889 = vtanh.pop %v825
        %v890 = vtanh.pop %v826
        %v891 = vtanh.pop %v827
        %v892 = vtanh.pop %v828
        %v893 = vtanh.pop %v829
        %v894 = vtanh.pop %v830
        %v895 = vtanh.pop %v831
        %v896 = vtanh.pop %v832
        %v897 = vtanh.pop %v833
        %v898 = vtanh.pop %v834
        %v899 = vtanh.pop %v835
        %v900 = vtanh.pop %v836
        %v901 = vtanh.pop %v837
        %v902 = vtanh.pop %v838
        %v903 = vtanh.pop %v839
        %v904 = vtanh.pop %v840
        %v905 = vtanh.pop %v841
        %v906 = vadd.f32 %v842, 1.0
        %v907 = vadd.f32 %v843, 1.0
        %v908 = vadd.f32 %v844, 1.0
        %v909 = vadd.f32 %v845, 1.0
        %v910 = vadd.f32 %v846, 1.0
        %v911 = vadd.f32 %v847, 1.0
        %v912 = vadd.f32 %v848, 1.0
        %v913 = vadd.f32 %v849, 1.0
        %v914 = vadd.f32 %v850, 1.0
        %v915 = vadd.f32 %v851, 1.0
        %v916 = vadd.f32 %v852, 1.0
        %v917 = vadd.f32 %v853, 1.0
        %v918 = vadd.f32 %v854, 1.0
        %v919 = vadd.f32 %v855, 1.0
        %v920 = vadd.f32 %v856, 1.0
        %v921 = vadd.f32 %v857, 1.0
        %v922 = vadd.f32 %v858, 1.0
        %v923 = vadd.f32 %v859, 1.0
        %v924 = vadd.f32 %v860, 1.0
        %v925 = vadd.f32 %v861, 1.0
        %v926 = vadd.f32 %v862, 1.0
        %v927 = vadd.f32 %v863, 1.0
        %v928 = vadd.f32 %v864, 1.0
        %v929 = vadd.f32 %v865, 1.0
        %v930 = vadd.f32 %v866, 1.0
        %v931 = vadd.f32 %v867, 1.0
        %v932 = vadd.f32 %v868, 1.0
        %v933 = vadd.f32 %v869, 1.0
        %v934 = vadd.f32 %v870, 1.0
        %v935 = vadd.f32 %v871, 1.0
        %v936 = vadd.f32 %v872, 1.0
        %v937 = vadd.f32 %v873, 1.0
        %v938 = vadd.f32 %v874, 1.0
        %v939 = vadd.f32 %v875, 1.0
        %v940 = vadd.f32 %v876, 1.0
        %v941 = vadd.f32 %v877, 1.0
        %v942 = vadd.f32 %v878, 1.0
        %v943 = vadd.f32 %v879, 1.0
        %v944 = vadd.f32 %v880, 1.0
        %v945 = vadd.f32 %v881, 1.0
        %v946 = vadd.f32 %v882, 1.0
        %v947 = vadd.f32 %v883, 1.0
        %v948 = vadd.f32 %v884, 1.0
        %v949 = vadd.f32 %v885, 1.0
        %v950 = vadd.f32 %v886, 1.0
        %v951 = vadd.f32 %v887, 1.0
        %v952 = vadd.f32 %v888, 1.0
        %v953 = vadd.f32 %v889, 1.0
        %v954 = vadd.f32 %v890, 1.0
        %v955 = vadd.f32 %v891, 1.0
        %v956 = vadd.f32 %v892, 1.0
        %v957 = vadd.f32 %v893, 1.0
        %v958 = vadd.f32 %v894, 1.0
        %v959 = vadd.f32 %v895, 1.0
        %v960 = vadd.f32 %v896, 1.0
        %v961 = vadd.f32 %v897, 1.0
        %v962 = vadd.f32 %v898, 1.0
        %v963 = vadd.f32 %v899, 1.0
        %v964 = vadd.f32 %v900, 1.0
        %v965 = vadd.f32 %v901, 1.0
        %v966 = vadd.f32 %v902, 1.0
        %v967 = vadd.f32 %v903, 1.0
        %v968 = vadd.f32 %v904, 1.0
        %v969 = vadd.f32 %v905, 1.0
        %v970 = vmul.f32 %v778, %v906
        %v971 = vmul.f32 %v779, %v907
        %v972 = vmul.f32 %v780, %v908
        %v973 = vmul.f32 %v781, %v909
        %v974 = vmul.f32 %v782, %v910
        %v975 = vmul.f32 %v783, %v911
        %v976 = vmul.f32 %v784, %v912
        %v977 = vmul.f32 %v785, %v913
        %v978 = vmul.f32 %v786, %v914
        %v979 = vmul.f32 %v787, %v915
        %v980 = vmul.f32 %v788, %v916
        %v981 = vmul.f32 %v789, %v917
        %v982 = vmul.f32 %v790, %v918
        %v983 = vmul.f32 %v791, %v919
        %v984 = vmul.f32 %v792, %v920
        %v985 = vmul.f32 %v793, %v921
        %v986 = vmul.f32 %v794, %v922
        %v987 = vmul.f32 %v795, %v923
        %v988 = vmul.f32 %v796, %v924
        %v989 = vmul.f32 %v797, %v925
        %v990 = vmul.f32 %v798, %v926
        %v991 = vmul.f32 %v799, %v927
        %v992 = vmul.f32 %v800, %v928
        %v993 = vmul.f32 %v801, %v929
        %v994 = vmul.f32 %v802, %v930
        %v995 = vmul.f32 %v803, %v931
        %v996 = vmul.f32 %v804, %v932
        %v997 = vmul.f32 %v805, %v933
        %v998 = vmul.f32 %v806, %v934
        %v999 = vmul.f32 %v807, %v935
        %v1000 = vmul.f32 %v808, %v936
        %v1001 = vmul.f32 %v809, %v937
        %v1002 = vmul.f32 %v810, %v938
        %v1003 = vmul.f32 %v811, %v939
        %v1004 = vmul.f32 %v812, %v940
        %v1005 = vmul.f32 %v813, %v941
        %v1006 = vmul.f32 %v814, %v942
        %v1007 = vmul.f32 %v815, %v943
        %v1008 = vmul.f32 %v816, %v944
        %v1009 = vmul.f32 %v817, %v945
        %v1010 = vmul.f32 %v818, %v946
        %v1011 = vmul.f32 %v819, %v947
        %v1012 = vmul.f32 %v820, %v948
        %v1013 = vmul.f32 %v821, %v949
        %v1014 = vmul.f32 %v822, %v950
        %v1015 = vmul.f32 %v823, %v951
        %v1016 = vmul.f32 %v824, %v952
        %v1017 = vmul.f32 %v825, %v953
        %v1018 = vmul.f32 %v826, %v954
        %v1019 = vmul.f32 %v827, %v955
        %v1020 = vmul.f32 %v828, %v956
        %v1021 = vmul.f32 %v829, %v957
        %v1022 = vmul.f32 %v830, %v958
        %v1023 = vmul.f32 %v831, %v959
        %v1024 = vmul.f32 %v832, %v960
        %v1025 = vmul.f32 %v833, %v961
        %v1026 = vmul.f32 %v834, %v962
        %v1027 = vmul.f32 %v835, %v963
        %v1028 = vmul.f32 %v836, %v964
        %v1029 = vmul.f32 %v837, %v965
        %v1030 = vmul.f32 %v838, %v966
        %v1031 = vmul.f32 %v839, %v967
        %v1032 = vmul.f32 %v840, %v968
        %v1033 = vmul.f32 %v841, %v969
        %v1034 = vpack.c.bf16 %v971, %v970
        %v1035 = vpack.c.bf16 %v973, %v972
        %v1036 = vpack.c.bf16 %v975, %v974
        %v1037 = vpack.c.bf16 %v977, %v976
        %v1038 = vpack.c.bf16 %v979, %v978
        %v1039 = vpack.c.bf16 %v981, %v980
        %v1040 = vpack.c.bf16 %v983, %v982
        %v1041 = vpack.c.bf16 %v985, %v984
        %v1042 = vpack.c.bf16 %v987, %v986
        %v1043 = vpack.c.bf16 %v989, %v988
        %v1044 = vpack.c.bf16 %v991, %v990
        %v1045 = vpack.c.bf16 %v993, %v992
        %v1046 = vpack.c.bf16 %v995, %v994
        %v1047 = vpack.c.bf16 %v997, %v996
        %v1048 = vpack.c.bf16 %v999, %v998
        %v1049 = vpack.c.bf16 %v1001, %v1000
        %v1050 = vpack.c.bf16 %v1003, %v1002
        %v1051 = vpack.c.bf16 %v1005, %v1004
        %v1052 = vpack.c.bf16 %v1007, %v1006
        %v1053 = vpack.c.bf16 %v1009, %v1008
        %v1054 = vpack.c.bf16 %v1011, %v1010
        %v1055 = vpack.c.bf16 %v1013, %v1012
        %v1056 = vpack.c.bf16 %v1015, %v1014
        %v1057 = vpack.c.bf16 %v1017, %v1016
        %v1058 = vpack.c.bf16 %v1019, %v1018
        %v1059 = vpack.c.bf16 %v1021, %v1020
        %v1060 = vpack.c.bf16 %v1023, %v1022
        %v1061 = vpack.c.bf16 %v1025, %v1024
        %v1062 = vpack.c.bf16 %v1027, %v1026
        %v1063 = vpack.c.bf16 %v1029, %v1028
        %v1064 = vpack.c.bf16 %v1031, %v1030
        %v1065 = vpack.c.bf16 %v1033, %v1032
        %v1066 = vld [vmem:[%s3] sm:$0xf]
        %v1067 = vld [vmem:[%s3 + $0x4] sm:$0xf]
        %v1068 = vld [vmem:[%s3 + $0x8] sm:$0xf]
        %v1069 = vld [vmem:[%s3 + $0xc] sm:$0xf]
        %v1070 = vld [vmem:[%s4] sm:$0x1]
        %v1072 = vlaneseq
        %v1073 = vshrl.u32 %v1072, 7
        %v1074 = vsub.s32 0, %v1073
        %v1075 = vrot.slane %v1070, %v1074
        %v1081 = vunpack.c.l.b16 %v1066
        %v1082 = vunpack.c.l.b16 %v1067
        %v1083 = vunpack.c.l.b16 %v1068
        %v1084 = vunpack.c.l.b16 %v1069
        %v1085 = vpack.c.b16 %v1082, %v1081
        %v1086 = vpack.c.b16 %v1084, %v1083
        %vm1089 = vcmask 261120
        %v1091 = vsel %vm1089, %v1034, 0
        %v1094 = vsel %vm1089, %v1035, 0
        %v1097 = vsel %vm1089, %v1036, 0
        %v1100 = vsel %vm1089, %v1037, 0
        %v1103 = vsel %vm1089, %v1038, 0
        %v1106 = vsel %vm1089, %v1039, 0
        %v1109 = vsel %vm1089, %v1040, 0
        %v1112 = vsel %vm1089, %v1041, 0
        %v1115 = vsel %vm1089, %v1042, 0
        %v1118 = vsel %vm1089, %v1043, 0
        %v1121 = vsel %vm1089, %v1044, 0
        %v1124 = vsel %vm1089, %v1045, 0
        %v1127 = vsel %vm1089, %v1046, 0
        %v1130 = vsel %vm1089, %v1047, 0
        %v1133 = vsel %vm1089, %v1048, 0
        %v1136 = vsel %vm1089, %v1049, 0
        %v1139 = vsel %vm1089, %v1050, 0
        %v1142 = vsel %vm1089, %v1051, 0
        %v1145 = vsel %vm1089, %v1052, 0
        %v1148 = vsel %vm1089, %v1053, 0
        %v1151 = vsel %vm1089, %v1054, 0
        %v1154 = vsel %vm1089, %v1055, 0
        %v1157 = vsel %vm1089, %v1056, 0
        %v1160 = vsel %vm1089, %v1057, 0
        %v1163 = vsel %vm1089, %v1058, 0
        %v1166 = vsel %vm1089, %v1059, 0
        %v1169 = vsel %vm1089, %v1060, 0
        %v1172 = vsel %vm1089, %v1061, 0
        %v1175 = vsel %vm1089, %v1062, 0
        %v1178 = vsel %vm1089, %v1063, 0
        %v1181 = vsel %vm1089, %v1064, 0
        %v1184 = vsel %vm1089, %v1065, 0
        %1186 = vmatprep.subr.bf16.mxu0 0
        %1187 = vmatpush1.bf16.msra.mxu0 %v1085
        %1188 = vmatprep.subr.bf16.mxu0 0
        %1189 = vmatpush1.bf16.msra.mxu0 %v1086
        %1190 = vmatprep.subr.bf16.mxu0 0
        %1191 = vmatpush1.bf16.msra.mxu0 0
        %1192 = vmatprep.subr.bf16.mxu0 0
        %1193 = vmatpush1.bf16.msra.mxu0 0
        %1194 = vmatprep.subr.bf16.mxu0 0
        %1195 = vmatpush1.bf16.msra.mxu0 0
        %1196 = vmatprep.subr.bf16.mxu0 0
        %1197 = vmatpush1.bf16.msra.mxu0 0
        %1198 = vmatprep.subr.bf16.mxu0 0
        %1199 = vmatpush1.bf16.msra.mxu0 0
        %1200 = vmatprep.subr.bf16.mxu0 0
        %1201 = vmatpush1.bf16.msra.mxu0 0
        %1202 = vmatprep.subr.bf16.mxu0 0
        %1203 = vmatpush1.bf16.msra.mxu0 0
        %1204 = vmatprep.subr.bf16.mxu0 0
        %1205 = vmatpush1.bf16.msra.mxu0 0
        %1206 = vmatprep.subr.bf16.mxu0 0
        %1207 = vmatpush1.bf16.msra.mxu0 0
        %1208 = vmatprep.subr.bf16.mxu0 0
        %1209 = vmatpush1.bf16.msra.mxu0 0
        %1210 = vmatprep.subr.bf16.mxu0 0
        %1211 = vmatpush1.bf16.msra.mxu0 0
        %1212 = vmatprep.subr.bf16.mxu0 0
        %1213 = vmatpush1.bf16.msra.mxu0 0
        %1214 = vmatprep.subr.bf16.mxu0 0
        %1215 = vmatpush1.bf16.msra.mxu0 0
        %1216 = vmatprep.subr.bf16.mxu0 0
        %1217 = vmatpush1.bf16.msra.mxu0 0
        %1218 = vmatprep.mubr.bf16.mxu0 0
        %1219 = vmatmul.mubr.bf16.gmra.mrb[0].mxu0 %v1091
        %v1220 = vpop.f32.mrb[0].mxu0
        %v1221 = vadd.f32 %v1075, %v1220
        %v1222 = vpop.f32.mrb[0].mxu0
        %v1223 = vpop.f32.mrb[0].mxu0
        %v1224 = vadd.f32 %v1075, %v1223
        %v1225 = vpop.f32.mrb[0].mxu0
        %1226 = vmatprep.mubr.bf16.mxu0 0
        %1227 = vmatmul.mubr.bf16.gmra.mrb[0].mxu0 %v1094
        %v1228 = vpop.f32.mrb[0].mxu0
        %v1229 = vadd.f32 %v1075, %v1228
        %v1230 = vpop.f32.mrb[0].mxu0
        %v1231 = vpop.f32.mrb[0].mxu0
        %v1232 = vadd.f32 %v1075, %v1231
        %v1233 = vpop.f32.mrb[0].mxu0
        %1234 = vmatprep.mubr.bf16.mxu0 0
        %1235 = vmatmul.mubr.bf16.gmra.mrb[0].mxu0 %v1097
        %v1236 = vpop.f32.mrb[0].mxu0
        %v1237 = vadd.f32 %v1075, %v1236
        %v1238 = vpop.f32.mrb[0].mxu0
        %v1239 = vpop.f32.mrb[0].mxu0
        %v1240 = vadd.f32 %v1075, %v1239
        %v1241 = vpop.f32.mrb[0].mxu0
        %1242 = vmatprep.mubr.bf16.mxu0 0
        %1243 = vmatmul.mubr.bf16.gmra.mrb[0].mxu0 %v1100
        %v1244 = vpop.f32.mrb[0].mxu0
        %v1245 = vadd.f32 %v1075, %v1244
        %v1246 = vpop.f32.mrb[0].mxu0
        %v1247 = vpop.f32.mrb[0].mxu0
        %v1248 = vadd.f32 %v1075, %v1247
        %v1249 = vpop.f32.mrb[0].mxu0
        %1250 = vmatprep.mubr.bf16.mxu0 0
        %1251 = vmatmul.mubr.bf16.gmra.mrb[0].mxu0 %v1103
        %v1252 = vpop.f32.mrb[0].mxu0
        %v1253 = vadd.f32 %v1075, %v1252
        %v1254 = vpop.f32.mrb[0].mxu0
        %v1255 = vpop.f32.mrb[0].mxu0
        %v1256 = vadd.f32 %v1075, %v1255
        %v1257 = vpop.f32.mrb[0].mxu0
        %1258 = vmatprep.mubr.bf16.mxu0 0
        %1259 = vmatmul.mubr.bf16.gmra.mrb[0].mxu0 %v1106
        %v1260 = vpop.f32.mrb[0].mxu0
        %v1261 = vadd.f32 %v1075, %v1260
        %v1262 = vpop.f32.mrb[0].mxu0
        %v1263 = vpop.f32.mrb[0].mxu0
        %v1264 = vadd.f32 %v1075, %v1263
        %v1265 = vpop.f32.mrb[0].mxu0
        %1266 = vmatprep.mubr.bf16.mxu0 0
        %1267 = vmatmul.mubr.bf16.gmra.mrb[0].mxu0 %v1109
        %v1268 = vpop.f32.mrb[0].mxu0
        %v1269 = vadd.f32 %v1075, %v1268
        %v1270 = vpop.f32.mrb[0].mxu0
        %v1271 = vpop.f32.mrb[0].mxu0
        %v1272 = vadd.f32 %v1075, %v1271
        %v1273 = vpop.f32.mrb[0].mxu0
        %1274 = vmatprep.mubr.bf16.mxu0 0
        %1275 = vmatmul.mubr.bf16.gmra.mrb[0].mxu0 %v1112
        %v1276 = vpop.f32.mrb[0].mxu0
        %v1277 = vadd.f32 %v1075, %v1276
        %v1278 = vpop.f32.mrb[0].mxu0
        %v1279 = vpop.f32.mrb[0].mxu0
        %v1280 = vadd.f32 %v1075, %v1279
        %v1281 = vpop.f32.mrb[0].mxu0
        %1282 = vmatprep.mubr.bf16.mxu0 0
        %1283 = vmatmul.mubr.bf16.gmra.mrb[0].mxu0 %v1115
        %v1284 = vpop.f32.mrb[0].mxu0
        %v1285 = vadd.f32 %v1075, %v1284
        %v1286 = vpop.f32.mrb[0].mxu0
        %v1287 = vpop.f32.mrb[0].mxu0
        %v1288 = vadd.f32 %v1075, %v1287
        %v1289 = vpop.f32.mrb[0].mxu0
        %1290 = vmatprep.mubr.bf16.mxu0 0
        %1291 = vmatmul.mubr.bf16.gmra.mrb[0].mxu0 %v1118
        %v1292 = vpop.f32.mrb[0].mxu0
        %v1293 = vadd.f32 %v1075, %v1292
        %v1294 = vpop.f32.mrb[0].mxu0
        %v1295 = vpop.f32.mrb[0].mxu0
        %v1296 = vadd.f32 %v1075, %v1295
        %v1297 = vpop.f32.mrb[0].mxu0
        %1298 = vmatprep.mubr.bf16.mxu0 0
        %1299 = vmatmul.mubr.bf16.gmra.mrb[0].mxu0 %v1121
        %v1300 = vpop.f32.mrb[0].mxu0
        %v1301 = vadd.f32 %v1075, %v1300
        %v1302 = vpop.f32.mrb[0].mxu0
        %v1303 = vpop.f32.mrb[0].mxu0
        %v1304 = vadd.f32 %v1075, %v1303
        %v1305 = vpop.f32.mrb[0].mxu0
        %1306 = vmatprep.mubr.bf16.mxu0 0
        %1307 = vmatmul.mubr.bf16.gmra.mrb[0].mxu0 %v1124
        %v1308 = vpop.f32.mrb[0].mxu0
        %v1309 = vadd.f32 %v1075, %v1308
        %v1310 = vpop.f32.mrb[0].mxu0
        %v1311 = vpop.f32.mrb[0].mxu0
        %v1312 = vadd.f32 %v1075, %v1311
        %v1313 = vpop.f32.mrb[0].mxu0
        %1314 = vmatprep.mubr.bf16.mxu0 0
        %1315 = vmatmul.mubr.bf16.gmra.mrb[0].mxu0 %v1127
        %v1316 = vpop.f32.mrb[0].mxu0
        %v1317 = vadd.f32 %v1075, %v1316
        %v1318 = vpop.f32.mrb[0].mxu0
        %v1319 = vpop.f32.mrb[0].mxu0
        %v1320 = vadd.f32 %v1075, %v1319
        %v1321 = vpop.f32.mrb[0].mxu0
        %1322 = vmatprep.mubr.bf16.mxu0 0
        %1323 = vmatmul.mubr.bf16.gmra.mrb[0].mxu0 %v1130
        %v1324 = vpop.f32.mrb[0].mxu0
        %v1325 = vadd.f32 %v1075, %v1324
        %v1326 = vpop.f32.mrb[0].mxu0
        %v1327 = vpop.f32.mrb[0].mxu0
        %v1328 = vadd.f32 %v1075, %v1327
        %v1329 = vpop.f32.mrb[0].mxu0
        %1330 = vmatprep.mubr.bf16.mxu0 0
        %1331 = vmatmul.mubr.bf16.gmra.mrb[0].mxu0 %v1133
        %v1332 = vpop.f32.mrb[0].mxu0
        %v1333 = vadd.f32 %v1075, %v1332
        %v1334 = vpop.f32.mrb[0].mxu0
        %v1335 = vpop.f32.mrb[0].mxu0
        %v1336 = vadd.f32 %v1075, %v1335
        %v1337 = vpop.f32.mrb[0].mxu0
        %1338 = vmatprep.mubr.bf16.mxu0 0
        %1339 = vmatmul.mubr.bf16.gmra.mrb[0].mxu0 %v1136
        %v1340 = vpop.f32.mrb[0].mxu0
        %v1341 = vadd.f32 %v1075, %v1340
        %v1342 = vpop.f32.mrb[0].mxu0
        %v1343 = vpop.f32.mrb[0].mxu0
        %v1344 = vadd.f32 %v1075, %v1343
        %v1345 = vpop.f32.mrb[0].mxu0
        %1346 = vmatprep.mubr.bf16.mxu0 0
        %1347 = vmatmul.mubr.bf16.gmra.mrb[0].mxu0 %v1139
        %v1348 = vpop.f32.mrb[0].mxu0
        %v1349 = vadd.f32 %v1075, %v1348
        %v1350 = vpop.f32.mrb[0].mxu0
        %v1351 = vpop.f32.mrb[0].mxu0
        %v1352 = vadd.f32 %v1075, %v1351
        %v1353 = vpop.f32.mrb[0].mxu0
        %1354 = vmatprep.mubr.bf16.mxu0 0
        %1355 = vmatmul.mubr.bf16.gmra.mrb[0].mxu0 %v1142
        %v1356 = vpop.f32.mrb[0].mxu0
        %v1357 = vadd.f32 %v1075, %v1356
        %v1358 = vpop.f32.mrb[0].mxu0
        %v1359 = vpop.f32.mrb[0].mxu0
        %v1360 = vadd.f32 %v1075, %v1359
        %v1361 = vpop.f32.mrb[0].mxu0
        %1362 = vmatprep.mubr.bf16.mxu0 0
        %1363 = vmatmul.mubr.bf16.gmra.mrb[0].mxu0 %v1145
        %v1364 = vpop.f32.mrb[0].mxu0
        %v1365 = vadd.f32 %v1075, %v1364
        %v1366 = vpop.f32.mrb[0].mxu0
        %v1367 = vpop.f32.mrb[0].mxu0
        %v1368 = vadd.f32 %v1075, %v1367
        %v1369 = vpop.f32.mrb[0].mxu0
        %1370 = vmatprep.mubr.bf16.mxu0 0
        %1371 = vmatmul.mubr.bf16.gmra.mrb[0].mxu0 %v1148
        %v1372 = vpop.f32.mrb[0].mxu0
        %v1373 = vadd.f32 %v1075, %v1372
        %v1374 = vpop.f32.mrb[0].mxu0
        %v1375 = vpop.f32.mrb[0].mxu0
        %v1376 = vadd.f32 %v1075, %v1375
        %v1377 = vpop.f32.mrb[0].mxu0
        %1378 = vmatprep.mubr.bf16.mxu0 0
        %1379 = vmatmul.mubr.bf16.gmra.mrb[0].mxu0 %v1151
        %v1380 = vpop.f32.mrb[0].mxu0
        %v1381 = vadd.f32 %v1075, %v1380
        %v1382 = vpop.f32.mrb[0].mxu0
        %v1383 = vpop.f32.mrb[0].mxu0
        %v1384 = vadd.f32 %v1075, %v1383
        %v1385 = vpop.f32.mrb[0].mxu0
        %1386 = vmatprep.mubr.bf16.mxu0 0
        %1387 = vmatmul.mubr.bf16.gmra.mrb[0].mxu0 %v1154
        %v1388 = vpop.f32.mrb[0].mxu0
        %v1389 = vadd.f32 %v1075, %v1388
        %v1390 = vpop.f32.mrb[0].mxu0
        %v1391 = vpop.f32.mrb[0].mxu0
        %v1392 = vadd.f32 %v1075, %v1391
        %v1393 = vpop.f32.mrb[0].mxu0
        %1394 = vmatprep.mubr.bf16.mxu0 0
        %1395 = vmatmul.mubr.bf16.gmra.mrb[0].mxu0 %v1157
        %v1396 = vpop.f32.mrb[0].mxu0
        %v1397 = vadd.f32 %v1075, %v1396
        %v1398 = vpop.f32.mrb[0].mxu0
        %v1399 = vpop.f32.mrb[0].mxu0
        %v1400 = vadd.f32 %v1075, %v1399
        %v1401 = vpop.f32.mrb[0].mxu0
        %1402 = vmatprep.mubr.bf16.mxu0 0
        %1403 = vmatmul.mubr.bf16.gmra.mrb[0].mxu0 %v1160
        %v1404 = vpop.f32.mrb[0].mxu0
        %v1405 = vadd.f32 %v1075, %v1404
        %v1406 = vpop.f32.mrb[0].mxu0
        %v1407 = vpop.f32.mrb[0].mxu0
        %v1408 = vadd.f32 %v1075, %v1407
        %v1409 = vpop.f32.mrb[0].mxu0
        %1410 = vmatprep.mubr.bf16.mxu0 0
        %1411 = vmatmul.mubr.bf16.gmra.mrb[0].mxu0 %v1163
        %v1412 = vpop.f32.mrb[0].mxu0
        %v1413 = vadd.f32 %v1075, %v1412
        %v1414 = vpop.f32.mrb[0].mxu0
        %v1415 = vpop.f32.mrb[0].mxu0
        %v1416 = vadd.f32 %v1075, %v1415
        %v1417 = vpop.f32.mrb[0].mxu0
        %1418 = vmatprep.mubr.bf16.mxu0 0
        %1419 = vmatmul.mubr.bf16.gmra.mrb[0].mxu0 %v1166
        %v1420 = vpop.f32.mrb[0].mxu0
        %v1421 = vadd.f32 %v1075, %v1420
        %v1422 = vpop.f32.mrb[0].mxu0
        %v1423 = vpop.f32.mrb[0].mxu0
        %v1424 = vadd.f32 %v1075, %v1423
        %v1425 = vpop.f32.mrb[0].mxu0
        %1426 = vmatprep.mubr.bf16.mxu0 0
        %1427 = vmatmul.mubr.bf16.gmra.mrb[0].mxu0 %v1169
        %v1428 = vpop.f32.mrb[0].mxu0
        %v1429 = vadd.f32 %v1075, %v1428
        %v1430 = vpop.f32.mrb[0].mxu0
        %v1431 = vpop.f32.mrb[0].mxu0
        %v1432 = vadd.f32 %v1075, %v1431
        %v1433 = vpop.f32.mrb[0].mxu0
        %1434 = vmatprep.mubr.bf16.mxu0 0
        %1435 = vmatmul.mubr.bf16.gmra.mrb[0].mxu0 %v1172
        %v1436 = vpop.f32.mrb[0].mxu0
        %v1437 = vadd.f32 %v1075, %v1436
        %v1438 = vpop.f32.mrb[0].mxu0
        %v1439 = vpop.f32.mrb[0].mxu0
        %v1440 = vadd.f32 %v1075, %v1439
        %v1441 = vpop.f32.mrb[0].mxu0
        %1442 = vmatprep.mubr.bf16.mxu0 0
        %1443 = vmatmul.mubr.bf16.gmra.mrb[0].mxu0 %v1175
        %v1444 = vpop.f32.mrb[0].mxu0
        %v1445 = vadd.f32 %v1075, %v1444
        %v1446 = vpop.f32.mrb[0].mxu0
        %v1447 = vpop.f32.mrb[0].mxu0
        %v1448 = vadd.f32 %v1075, %v1447
        %v1449 = vpop.f32.mrb[0].mxu0
        %1450 = vmatprep.mubr.bf16.mxu0 0
        %1451 = vmatmul.mubr.bf16.gmra.mrb[0].mxu0 %v1178
        %v1452 = vpop.f32.mrb[0].mxu0
        %v1453 = vadd.f32 %v1075, %v1452
        %v1454 = vpop.f32.mrb[0].mxu0
        %v1455 = vpop.f32.mrb[0].mxu0
        %v1456 = vadd.f32 %v1075, %v1455
        %v1457 = vpop.f32.mrb[0].mxu0
        %1458 = vmatprep.mubr.bf16.mxu0 0
        %1459 = vmatmul.mubr.bf16.gmra.mrb[0].mxu0 %v1181
        %v1460 = vpop.f32.mrb[0].mxu0
        %v1461 = vadd.f32 %v1075, %v1460
        %v1462 = vpop.f32.mrb[0].mxu0
        %v1463 = vpop.f32.mrb[0].mxu0
        %v1464 = vadd.f32 %v1075, %v1463
        %v1465 = vpop.f32.mrb[0].mxu0
        %1466 = vmatprep.mubr.bf16.mxu0 0
        %1467 = vmatmul.mubr.bf16.gmra.mrb[0].mxu0 %v1184
        %v1468 = vpop.f32.mrb[0].mxu0
        %v1469 = vadd.f32 %v1075, %v1468
        %v1470 = vpop.f32.mrb[0].mxu0
        %v1471 = vpop.f32.mrb[0].mxu0
        %v1472 = vadd.f32 %v1075, %v1471
        %v1473 = vpop.f32.mrb[0].mxu0
        %1474 = vdwg.mxu0
        %v1475 = vmul.f32 %v1221, 0.5
        %v1476 = vmul.f32 %v1224, 0.5
        %v1477 = vmul.f32 %v1229, 0.5
        %v1478 = vmul.f32 %v1232, 0.5
        %v1479 = vmul.f32 %v1237, 0.5
        %v1480 = vmul.f32 %v1240, 0.5
        %v1481 = vmul.f32 %v1245, 0.5
        %v1482 = vmul.f32 %v1248, 0.5
        %v1483 = vmul.f32 %v1253, 0.5
        %v1484 = vmul.f32 %v1256, 0.5
        %v1485 = vmul.f32 %v1261, 0.5
        %v1486 = vmul.f32 %v1264, 0.5
        %v1487 = vmul.f32 %v1269, 0.5
        %v1488 = vmul.f32 %v1272, 0.5
        %v1489 = vmul.f32 %v1277, 0.5
        %v1490 = vmul.f32 %v1280, 0.5
        %v1491 = vmul.f32 %v1285, 0.5
        %v1492 = vmul.f32 %v1288, 0.5
        %v1493 = vmul.f32 %v1293, 0.5
        %v1494 = vmul.f32 %v1296, 0.5
        %v1495 = vmul.f32 %v1301, 0.5
        %v1496 = vmul.f32 %v1304, 0.5
        %v1497 = vmul.f32 %v1309, 0.5
        %v1498 = vmul.f32 %v1312, 0.5
        %v1499 = vmul.f32 %v1317, 0.5
        %v1500 = vmul.f32 %v1320, 0.5
        %v1501 = vmul.f32 %v1325, 0.5
        %v1502 = vmul.f32 %v1328, 0.5
        %v1503 = vmul.f32 %v1333, 0.5
        %v1504 = vmul.f32 %v1336, 0.5
        %v1505 = vmul.f32 %v1341, 0.5
        %v1506 = vmul.f32 %v1344, 0.5
        %v1507 = vmul.f32 %v1349, 0.5
        %v1508 = vmul.f32 %v1352, 0.5
        %v1509 = vmul.f32 %v1357, 0.5
        %v1510 = vmul.f32 %v1360, 0.5
        %v1511 = vmul.f32 %v1365, 0.5
        %v1512 = vmul.f32 %v1368, 0.5
        %v1513 = vmul.f32 %v1373, 0.5
        %v1514 = vmul.f32 %v1376, 0.5
        %v1515 = vmul.f32 %v1381, 0.5
        %v1516 = vmul.f32 %v1384, 0.5
        %v1517 = vmul.f32 %v1389, 0.5
        %v1518 = vmul.f32 %v1392, 0.5
        %v1519 = vmul.f32 %v1397, 0.5
        %v1520 = vmul.f32 %v1400, 0.5
        %v1521 = vmul.f32 %v1405, 0.5
        %v1522 = vmul.f32 %v1408, 0.5
        %v1523 = vmul.f32 %v1413, 0.5
        %v1524 = vmul.f32 %v1416, 0.5
        %v1525 = vmul.f32 %v1421, 0.5
        %v1526 = vmul.f32 %v1424, 0.5
        %v1527 = vmul.f32 %v1429, 0.5
        %v1528 = vmul.f32 %v1432, 0.5
        %v1529 = vmul.f32 %v1437, 0.5
        %v1530 = vmul.f32 %v1440, 0.5
        %v1531 = vmul.f32 %v1445, 0.5
        %v1532 = vmul.f32 %v1448, 0.5
        %v1533 = vmul.f32 %v1453, 0.5
        %v1534 = vmul.f32 %v1456, 0.5
        %v1535 = vmul.f32 %v1461, 0.5
        %v1536 = vmul.f32 %v1464, 0.5
        %v1537 = vmul.f32 %v1469, 0.5
        %v1538 = vmul.f32 %v1472, 0.5
        %v1539 = vtanh.pop %v1475
        %v1540 = vtanh.pop %v1476
        %v1541 = vtanh.pop %v1477
        %v1542 = vtanh.pop %v1478
        %v1543 = vtanh.pop %v1479
        %v1544 = vtanh.pop %v1480
        %v1545 = vtanh.pop %v1481
        %v1546 = vtanh.pop %v1482
        %v1547 = vtanh.pop %v1483
        %v1548 = vtanh.pop %v1484
        %v1549 = vtanh.pop %v1485
        %v1550 = vtanh.pop %v1486
        %v1551 = vtanh.pop %v1487
        %v1552 = vtanh.pop %v1488
        %v1553 = vtanh.pop %v1489
        %v1554 = vtanh.pop %v1490
        %v1555 = vtanh.pop %v1491
        %v1556 = vtanh.pop %v1492
        %v1557 = vtanh.pop %v1493
        %v1558 = vtanh.pop %v1494
        %v1559 = vtanh.pop %v1495
        %v1560 = vtanh.pop %v1496
        %v1561 = vtanh.pop %v1497
        %v1562 = vtanh.pop %v1498
        %v1563 = vtanh.pop %v1499
        %v1564 = vtanh.pop %v1500
        %v1565 = vtanh.pop %v1501
        %v1566 = vtanh.pop %v1502
        %v1567 = vtanh.pop %v1503
        %v1568 = vtanh.pop %v1504
        %v1569 = vtanh.pop %v1505
        %v1570 = vtanh.pop %v1506
        %v1571 = vtanh.pop %v1507
        %v1572 = vtanh.pop %v1508
        %v1573 = vtanh.pop %v1509
        %v1574 = vtanh.pop %v1510
        %v1575 = vtanh.pop %v1511
        %v1576 = vtanh.pop %v1512
        %v1577 = vtanh.pop %v1513
        %v1578 = vtanh.pop %v1514
        %v1579 = vtanh.pop %v1515
        %v1580 = vtanh.pop %v1516
        %v1581 = vtanh.pop %v1517
        %v1582 = vtanh.pop %v1518
        %v1583 = vtanh.pop %v1519
        %v1584 = vtanh.pop %v1520
        %v1585 = vtanh.pop %v1521
        %v1586 = vtanh.pop %v1522
        %v1587 = vtanh.pop %v1523
        %v1588 = vtanh.pop %v1524
        %v1589 = vtanh.pop %v1525
        %v1590 = vtanh.pop %v1526
        %v1591 = vtanh.pop %v1527
        %v1592 = vtanh.pop %v1528
        %v1593 = vtanh.pop %v1529
        %v1594 = vtanh.pop %v1530
        %v1595 = vtanh.pop %v1531
        %v1596 = vtanh.pop %v1532
        %v1597 = vtanh.pop %v1533
        %v1598 = vtanh.pop %v1534
        %v1599 = vtanh.pop %v1535
        %v1600 = vtanh.pop %v1536
        %v1601 = vtanh.pop %v1537
        %v1602 = vtanh.pop %v1538
        %v1603 = vadd.f32 %v1539, 1.0
        %v1604 = vadd.f32 %v1540, 1.0
        %v1605 = vadd.f32 %v1541, 1.0
        %v1606 = vadd.f32 %v1542, 1.0
        %v1607 = vadd.f32 %v1543, 1.0
        %v1608 = vadd.f32 %v1544, 1.0
        %v1609 = vadd.f32 %v1545, 1.0
        %v1610 = vadd.f32 %v1546, 1.0
        %v1611 = vadd.f32 %v1547, 1.0
        %v1612 = vadd.f32 %v1548, 1.0
        %v1613 = vadd.f32 %v1549, 1.0
        %v1614 = vadd.f32 %v1550, 1.0
        %v1615 = vadd.f32 %v1551, 1.0
        %v1616 = vadd.f32 %v1552, 1.0
        %v1617 = vadd.f32 %v1553, 1.0
        %v1618 = vadd.f32 %v1554, 1.0
        %v1619 = vadd.f32 %v1555, 1.0
        %v1620 = vadd.f32 %v1556, 1.0
        %v1621 = vadd.f32 %v1557, 1.0
        %v1622 = vadd.f32 %v1558, 1.0
        %v1623 = vadd.f32 %v1559, 1.0
        %v1624 = vadd.f32 %v1560, 1.0
        %v1625 = vadd.f32 %v1561, 1.0
        %v1626 = vadd.f32 %v1562, 1.0
        %v1627 = vadd.f32 %v1563, 1.0
        %v1628 = vadd.f32 %v1564, 1.0
        %v1629 = vadd.f32 %v1565, 1.0
        %v1630 = vadd.f32 %v1566, 1.0
        %v1631 = vadd.f32 %v1567, 1.0
        %v1632 = vadd.f32 %v1568, 1.0
        %v1633 = vadd.f32 %v1569, 1.0
        %v1634 = vadd.f32 %v1570, 1.0
        %v1635 = vadd.f32 %v1571, 1.0
        %v1636 = vadd.f32 %v1572, 1.0
        %v1637 = vadd.f32 %v1573, 1.0
        %v1638 = vadd.f32 %v1574, 1.0
        %v1639 = vadd.f32 %v1575, 1.0
        %v1640 = vadd.f32 %v1576, 1.0
        %v1641 = vadd.f32 %v1577, 1.0
        %v1642 = vadd.f32 %v1578, 1.0
        %v1643 = vadd.f32 %v1579, 1.0
        %v1644 = vadd.f32 %v1580, 1.0
        %v1645 = vadd.f32 %v1581, 1.0
        %v1646 = vadd.f32 %v1582, 1.0
        %v1647 = vadd.f32 %v1583, 1.0
        %v1648 = vadd.f32 %v1584, 1.0
        %v1649 = vadd.f32 %v1585, 1.0
        %v1650 = vadd.f32 %v1586, 1.0
        %v1651 = vadd.f32 %v1587, 1.0
        %v1652 = vadd.f32 %v1588, 1.0
        %v1653 = vadd.f32 %v1589, 1.0
        %v1654 = vadd.f32 %v1590, 1.0
        %v1655 = vadd.f32 %v1591, 1.0
        %v1656 = vadd.f32 %v1592, 1.0
        %v1657 = vadd.f32 %v1593, 1.0
        %v1658 = vadd.f32 %v1594, 1.0
        %v1659 = vadd.f32 %v1595, 1.0
        %v1660 = vadd.f32 %v1596, 1.0
        %v1661 = vadd.f32 %v1597, 1.0
        %v1662 = vadd.f32 %v1598, 1.0
        %v1663 = vadd.f32 %v1599, 1.0
        %v1664 = vadd.f32 %v1600, 1.0
        %v1665 = vadd.f32 %v1601, 1.0
        %v1666 = vadd.f32 %v1602, 1.0
        %v1667 = vmul.f32 %v1475, %v1603
        %v1668 = vmul.f32 %v1476, %v1604
        %v1669 = vmul.f32 %v1477, %v1605
        %v1670 = vmul.f32 %v1478, %v1606
        %v1671 = vmul.f32 %v1479, %v1607
        %v1672 = vmul.f32 %v1480, %v1608
        %v1673 = vmul.f32 %v1481, %v1609
        %v1674 = vmul.f32 %v1482, %v1610
        %v1675 = vmul.f32 %v1483, %v1611
        %v1676 = vmul.f32 %v1484, %v1612
        %v1677 = vmul.f32 %v1485, %v1613
        %v1678 = vmul.f32 %v1486, %v1614
        %v1679 = vmul.f32 %v1487, %v1615
        %v1680 = vmul.f32 %v1488, %v1616
        %v1681 = vmul.f32 %v1489, %v1617
        %v1682 = vmul.f32 %v1490, %v1618
        %v1683 = vmul.f32 %v1491, %v1619
        %v1684 = vmul.f32 %v1492, %v1620
        %v1685 = vmul.f32 %v1493, %v1621
        %v1686 = vmul.f32 %v1494, %v1622
        %v1687 = vmul.f32 %v1495, %v1623
        %v1688 = vmul.f32 %v1496, %v1624
        %v1689 = vmul.f32 %v1497, %v1625
        %v1690 = vmul.f32 %v1498, %v1626
        %v1691 = vmul.f32 %v1499, %v1627
        %v1692 = vmul.f32 %v1500, %v1628
        %v1693 = vmul.f32 %v1501, %v1629
        %v1694 = vmul.f32 %v1502, %v1630
        %v1695 = vmul.f32 %v1503, %v1631
        %v1696 = vmul.f32 %v1504, %v1632
        %v1697 = vmul.f32 %v1505, %v1633
        %v1698 = vmul.f32 %v1506, %v1634
        %v1699 = vmul.f32 %v1507, %v1635
        %v1700 = vmul.f32 %v1508, %v1636
        %v1701 = vmul.f32 %v1509, %v1637
        %v1702 = vmul.f32 %v1510, %v1638
        %v1703 = vmul.f32 %v1511, %v1639
        %v1704 = vmul.f32 %v1512, %v1640
        %v1705 = vmul.f32 %v1513, %v1641
        %v1706 = vmul.f32 %v1514, %v1642
        %v1707 = vmul.f32 %v1515, %v1643
        %v1708 = vmul.f32 %v1516, %v1644
        %v1709 = vmul.f32 %v1517, %v1645
        %v1710 = vmul.f32 %v1518, %v1646
        %v1711 = vmul.f32 %v1519, %v1647
        %v1712 = vmul.f32 %v1520, %v1648
        %v1713 = vmul.f32 %v1521, %v1649
        %v1714 = vmul.f32 %v1522, %v1650
        %v1715 = vmul.f32 %v1523, %v1651
        %v1716 = vmul.f32 %v1524, %v1652
        %v1717 = vmul.f32 %v1525, %v1653
        %v1718 = vmul.f32 %v1526, %v1654
        %v1719 = vmul.f32 %v1527, %v1655
        %v1720 = vmul.f32 %v1528, %v1656
        %v1721 = vmul.f32 %v1529, %v1657
        %v1722 = vmul.f32 %v1530, %v1658
        %v1723 = vmul.f32 %v1531, %v1659
        %v1724 = vmul.f32 %v1532, %v1660
        %v1725 = vmul.f32 %v1533, %v1661
        %v1726 = vmul.f32 %v1534, %v1662
        %v1727 = vmul.f32 %v1535, %v1663
        %v1728 = vmul.f32 %v1536, %v1664
        %v1729 = vmul.f32 %v1537, %v1665
        %v1730 = vmul.f32 %v1538, %v1666
        %v1731 = vpack.c.bf16 %v1668, %v1667
        %v1732 = vpack.c.bf16 %v1670, %v1669
        %v1733 = vpack.c.bf16 %v1672, %v1671
        %v1734 = vpack.c.bf16 %v1674, %v1673
        %v1735 = vpack.c.bf16 %v1676, %v1675
        %v1736 = vpack.c.bf16 %v1678, %v1677
        %v1737 = vpack.c.bf16 %v1680, %v1679
        %v1738 = vpack.c.bf16 %v1682, %v1681
        %v1739 = vpack.c.bf16 %v1684, %v1683
        %v1740 = vpack.c.bf16 %v1686, %v1685
        %v1741 = vpack.c.bf16 %v1688, %v1687
        %v1742 = vpack.c.bf16 %v1690, %v1689
        %v1743 = vpack.c.bf16 %v1692, %v1691
        %v1744 = vpack.c.bf16 %v1694, %v1693
        %v1745 = vpack.c.bf16 %v1696, %v1695
        %v1746 = vpack.c.bf16 %v1698, %v1697
        %v1747 = vpack.c.bf16 %v1700, %v1699
        %v1748 = vpack.c.bf16 %v1702, %v1701
        %v1749 = vpack.c.bf16 %v1704, %v1703
        %v1750 = vpack.c.bf16 %v1706, %v1705
        %v1751 = vpack.c.bf16 %v1708, %v1707
        %v1752 = vpack.c.bf16 %v1710, %v1709
        %v1753 = vpack.c.bf16 %v1712, %v1711
        %v1754 = vpack.c.bf16 %v1714, %v1713
        %v1755 = vpack.c.bf16 %v1716, %v1715
        %v1756 = vpack.c.bf16 %v1718, %v1717
        %v1757 = vpack.c.bf16 %v1720, %v1719
        %v1758 = vpack.c.bf16 %v1722, %v1721
        %v1759 = vpack.c.bf16 %v1724, %v1723
        %v1760 = vpack.c.bf16 %v1726, %v1725
        %v1761 = vpack.c.bf16 %v1728, %v1727
        %v1762 = vpack.c.bf16 %v1730, %v1729
        %v1763 = vld [vmem:[%s5] sm:$0xf]
        %v1764 = vld [vmem:[%s5 + $0x4] sm:$0xf]
        %v1765 = vld [vmem:[%s5 + $0x8] sm:$0xf]
        %v1766 = vld [vmem:[%s5 + $0xc] sm:$0xf]
        %v1767 = vld [vmem:[%s6] sm:$0x1]
        %v1769 = vlaneseq
        %v1770 = vshrl.u32 %v1769, 7
        %v1771 = vsub.s32 0, %v1770
        %v1772 = vrot.slane %v1767, %v1771
        %v1778 = vunpack.c.l.b16 %v1763
        %v1779 = vunpack.c.l.b16 %v1764
        %v1780 = vunpack.c.l.b16 %v1765
        %v1781 = vunpack.c.l.b16 %v1766
        %v1782 = vpack.c.b16 %v1779, %v1778
        %v1783 = vpack.c.b16 %v1781, %v1780
        %v1787 = vsel %vm1089, %v1731, 0
        %v1790 = vsel %vm1089, %v1732, 0
        %v1793 = vsel %vm1089, %v1733, 0
        %v1796 = vsel %vm1089, %v1734, 0
        %v1799 = vsel %vm1089, %v1735, 0
        %v1802 = vsel %vm1089, %v1736, 0
        %v1805 = vsel %vm1089, %v1737, 0
        %v1808 = vsel %vm1089, %v1738, 0
        %v1811 = vsel %vm1089, %v1739, 0
        %v1814 = vsel %vm1089, %v1740, 0
        %v1817 = vsel %vm1089, %v1741, 0
        %v1820 = vsel %vm1089, %v1742, 0
        %v1823 = vsel %vm1089, %v1743, 0
        %v1826 = vsel %vm1089, %v1744, 0
        %v1829 = vsel %vm1089, %v1745, 0
        %v1832 = vsel %vm1089, %v1746, 0
        %v1835 = vsel %vm1089, %v1747, 0
        %v1838 = vsel %vm1089, %v1748, 0
        %v1841 = vsel %vm1089, %v1749, 0
        %v1844 = vsel %vm1089, %v1750, 0
        %v1847 = vsel %vm1089, %v1751, 0
        %v1850 = vsel %vm1089, %v1752, 0
        %v1853 = vsel %vm1089, %v1753, 0
        %v1856 = vsel %vm1089, %v1754, 0
        %v1859 = vsel %vm1089, %v1755, 0
        %v1862 = vsel %vm1089, %v1756, 0
        %v1865 = vsel %vm1089, %v1757, 0
        %v1868 = vsel %vm1089, %v1758, 0
        %v1871 = vsel %vm1089, %v1759, 0
        %v1874 = vsel %vm1089, %v1760, 0
        %v1877 = vsel %vm1089, %v1761, 0
        %v1880 = vsel %vm1089, %v1762, 0
        %1882 = vmatprep.subr.bf16.mxu0 0
        %1883 = vmatpush1.bf16.msra.mxu0 %v1782
        %1884 = vmatprep.subr.bf16.mxu0 0
        %1885 = vmatpush1.bf16.msra.mxu0 %v1783
        %1886 = vmatprep.subr.bf16.mxu0 0
        %1887 = vmatpush1.bf16.msra.mxu0 0
        %1888 = vmatprep.subr.bf16.mxu0 0
        %1889 = vmatpush1.bf16.msra.mxu0 0
        %1890 = vmatprep.subr.bf16.mxu0 0
        %1891 = vmatpush1.bf16.msra.mxu0 0
        %1892 = vmatprep.subr.bf16.mxu0 0
        %1893 = vmatpush1.bf16.msra.mxu0 0
        %1894 = vmatprep.subr.bf16.mxu0 0
        %1895 = vmatpush1.bf16.msra.mxu0 0
        %1896 = vmatprep.subr.bf16.mxu0 0
        %1897 = vmatpush1.bf16.msra.mxu0 0
        %1898 = vmatprep.subr.bf16.mxu0 0
        %1899 = vmatpush1.bf16.msra.mxu0 0
        %1900 = vmatprep.subr.bf16.mxu0 0
        %1901 = vmatpush1.bf16.msra.mxu0 0
        %1902 = vmatprep.subr.bf16.mxu0 0
        %1903 = vmatpush1.bf16.msra.mxu0 0
        %1904 = vmatprep.subr.bf16.mxu0 0
        %1905 = vmatpush1.bf16.msra.mxu0 0
        %1906 = vmatprep.subr.bf16.mxu0 0
        %1907 = vmatpush1.bf16.msra.mxu0 0
        %1908 = vmatprep.subr.bf16.mxu0 0
        %1909 = vmatpush1.bf16.msra.mxu0 0
        %1910 = vmatprep.subr.bf16.mxu0 0
        %1911 = vmatpush1.bf16.msra.mxu0 0
        %1912 = vmatprep.subr.bf16.mxu0 0
        %1913 = vmatpush1.bf16.msra.mxu0 0
        %1914 = vmatprep.mubr.bf16.mxu0 0
        %1915 = vmatmul.mubr.bf16.gmra.mrb[0].mxu0 %v1787
        %v1916 = vpop.f32.mrb[0].mxu0
        %v1917 = vadd.f32 %v1772, %v1916
        %v1918 = vpop.f32.mrb[0].mxu0
        %v1919 = vpop.f32.mrb[0].mxu0
        %v1920 = vadd.f32 %v1772, %v1919
        %v1921 = vpop.f32.mrb[0].mxu0
        %1922 = vmatprep.mubr.bf16.mxu0 0
        %1923 = vmatmul.mubr.bf16.gmra.mrb[0].mxu0 %v1790
        %v1924 = vpop.f32.mrb[0].mxu0
        %v1925 = vadd.f32 %v1772, %v1924
        %v1926 = vpop.f32.mrb[0].mxu0
        %v1927 = vpop.f32.mrb[0].mxu0
        %v1928 = vadd.f32 %v1772, %v1927
        %v1929 = vpop.f32.mrb[0].mxu0
        %1930 = vmatprep.mubr.bf16.mxu0 0
        %1931 = vmatmul.mubr.bf16.gmra.mrb[0].mxu0 %v1793
        %v1932 = vpop.f32.mrb[0].mxu0
        %v1933 = vadd.f32 %v1772, %v1932
        %v1934 = vpop.f32.mrb[0].mxu0
        %v1935 = vpop.f32.mrb[0].mxu0
        %v1936 = vadd.f32 %v1772, %v1935
        %v1937 = vpop.f32.mrb[0].mxu0
        %1938 = vmatprep.mubr.bf16.mxu0 0
        %1939 = vmatmul.mubr.bf16.gmra.mrb[0].mxu0 %v1796
        %v1940 = vpop.f32.mrb[0].mxu0
        %v1941 = vadd.f32 %v1772, %v1940
        %v1942 = vpop.f32.mrb[0].mxu0
        %v1943 = vpop.f32.mrb[0].mxu0
        %v1944 = vadd.f32 %v1772, %v1943
        %v1945 = vpop.f32.mrb[0].mxu0
        %1946 = vmatprep.mubr.bf16.mxu0 0
        %1947 = vmatmul.mubr.bf16.gmra.mrb[0].mxu0 %v1799
        %v1948 = vpop.f32.mrb[0].mxu0
        %v1949 = vadd.f32 %v1772, %v1948
        %v1950 = vpop.f32.mrb[0].mxu0
        %v1951 = vpop.f32.mrb[0].mxu0
        %v1952 = vadd.f32 %v1772, %v1951
        %v1953 = vpop.f32.mrb[0].mxu0
        %1954 = vmatprep.mubr.bf16.mxu0 0
        %1955 = vmatmul.mubr.bf16.gmra.mrb[0].mxu0 %v1802
        %v1956 = vpop.f32.mrb[0].mxu0
        %v1957 = vadd.f32 %v1772, %v1956
        %v1958 = vpop.f32.mrb[0].mxu0
        %v1959 = vpop.f32.mrb[0].mxu0
        %v1960 = vadd.f32 %v1772, %v1959
        %v1961 = vpop.f32.mrb[0].mxu0
        %1962 = vmatprep.mubr.bf16.mxu0 0
        %1963 = vmatmul.mubr.bf16.gmra.mrb[0].mxu0 %v1805
        %v1964 = vpop.f32.mrb[0].mxu0
        %v1965 = vadd.f32 %v1772, %v1964
        %v1966 = vpop.f32.mrb[0].mxu0
        %v1967 = vpop.f32.mrb[0].mxu0
        %v1968 = vadd.f32 %v1772, %v1967
        %v1969 = vpop.f32.mrb[0].mxu0
        %1970 = vmatprep.mubr.bf16.mxu0 0
        %1971 = vmatmul.mubr.bf16.gmra.mrb[0].mxu0 %v1808
        %v1972 = vpop.f32.mrb[0].mxu0
        %v1973 = vadd.f32 %v1772, %v1972
        %v1974 = vpop.f32.mrb[0].mxu0
        %v1975 = vpop.f32.mrb[0].mxu0
        %v1976 = vadd.f32 %v1772, %v1975
        %v1977 = vpop.f32.mrb[0].mxu0
        %1978 = vmatprep.mubr.bf16.mxu0 0
        %1979 = vmatmul.mubr.bf16.gmra.mrb[0].mxu0 %v1811
        %v1980 = vpop.f32.mrb[0].mxu0
        %v1981 = vadd.f32 %v1772, %v1980
        %v1982 = vpop.f32.mrb[0].mxu0
        %v1983 = vpop.f32.mrb[0].mxu0
        %v1984 = vadd.f32 %v1772, %v1983
        %v1985 = vpop.f32.mrb[0].mxu0
        %1986 = vmatprep.mubr.bf16.mxu0 0
        %1987 = vmatmul.mubr.bf16.gmra.mrb[0].mxu0 %v1814
        %v1988 = vpop.f32.mrb[0].mxu0
        %v1989 = vadd.f32 %v1772, %v1988
        %v1990 = vpop.f32.mrb[0].mxu0
        %v1991 = vpop.f32.mrb[0].mxu0
        %v1992 = vadd.f32 %v1772, %v1991
        %v1993 = vpop.f32.mrb[0].mxu0
        %1994 = vmatprep.mubr.bf16.mxu0 0
        %1995 = vmatmul.mubr.bf16.gmra.mrb[0].mxu0 %v1817
        %v1996 = vpop.f32.mrb[0].mxu0
        %v1997 = vadd.f32 %v1772, %v1996
        %v1998 = vpop.f32.mrb[0].mxu0
        %v1999 = vpop.f32.mrb[0].mxu0
        %v2000 = vadd.f32 %v1772, %v1999
        %v2001 = vpop.f32.mrb[0].mxu0
        %2002 = vmatprep.mubr.bf16.mxu0 0
        %2003 = vmatmul.mubr.bf16.gmra.mrb[0].mxu0 %v1820
        %v2004 = vpop.f32.mrb[0].mxu0
        %v2005 = vadd.f32 %v1772, %v2004
        %v2006 = vpop.f32.mrb[0].mxu0
        %v2007 = vpop.f32.mrb[0].mxu0
        %v2008 = vadd.f32 %v1772, %v2007
        %v2009 = vpop.f32.mrb[0].mxu0
        %2010 = vmatprep.mubr.bf16.mxu0 0
        %2011 = vmatmul.mubr.bf16.gmra.mrb[0].mxu0 %v1823
        %v2012 = vpop.f32.mrb[0].mxu0
        %v2013 = vadd.f32 %v1772, %v2012
        %v2014 = vpop.f32.mrb[0].mxu0
        %v2015 = vpop.f32.mrb[0].mxu0
        %v2016 = vadd.f32 %v1772, %v2015
        %v2017 = vpop.f32.mrb[0].mxu0
        %2018 = vmatprep.mubr.bf16.mxu0 0
        %2019 = vmatmul.mubr.bf16.gmra.mrb[0].mxu0 %v1826
        %v2020 = vpop.f32.mrb[0].mxu0
        %v2021 = vadd.f32 %v1772, %v2020
        %v2022 = vpop.f32.mrb[0].mxu0
        %v2023 = vpop.f32.mrb[0].mxu0
        %v2024 = vadd.f32 %v1772, %v2023
        %v2025 = vpop.f32.mrb[0].mxu0
        %2026 = vmatprep.mubr.bf16.mxu0 0
        %2027 = vmatmul.mubr.bf16.gmra.mrb[0].mxu0 %v1829
        %v2028 = vpop.f32.mrb[0].mxu0
        %v2029 = vadd.f32 %v1772, %v2028
        %v2030 = vpop.f32.mrb[0].mxu0
        %v2031 = vpop.f32.mrb[0].mxu0
        %v2032 = vadd.f32 %v1772, %v2031
        %v2033 = vpop.f32.mrb[0].mxu0
        %2034 = vmatprep.mubr.bf16.mxu0 0
        %2035 = vmatmul.mubr.bf16.gmra.mrb[0].mxu0 %v1832
        %v2036 = vpop.f32.mrb[0].mxu0
        %v2037 = vadd.f32 %v1772, %v2036
        %v2038 = vpop.f32.mrb[0].mxu0
        %v2039 = vpop.f32.mrb[0].mxu0
        %v2040 = vadd.f32 %v1772, %v2039
        %v2041 = vpop.f32.mrb[0].mxu0
        %2042 = vmatprep.mubr.bf16.mxu0 0
        %2043 = vmatmul.mubr.bf16.gmra.mrb[0].mxu0 %v1835
        %v2044 = vpop.f32.mrb[0].mxu0
        %v2045 = vadd.f32 %v1772, %v2044
        %v2046 = vpop.f32.mrb[0].mxu0
        %v2047 = vpop.f32.mrb[0].mxu0
        %v2048 = vadd.f32 %v1772, %v2047
        %v2049 = vpop.f32.mrb[0].mxu0
        %2050 = vmatprep.mubr.bf16.mxu0 0
        %2051 = vmatmul.mubr.bf16.gmra.mrb[0].mxu0 %v1838
        %v2052 = vpop.f32.mrb[0].mxu0
        %v2053 = vadd.f32 %v1772, %v2052
        %v2054 = vpop.f32.mrb[0].mxu0
        %v2055 = vpop.f32.mrb[0].mxu0
        %v2056 = vadd.f32 %v1772, %v2055
        %v2057 = vpop.f32.mrb[0].mxu0
        %2058 = vmatprep.mubr.bf16.mxu0 0
        %2059 = vmatmul.mubr.bf16.gmra.mrb[0].mxu0 %v1841
        %v2060 = vpop.f32.mrb[0].mxu0
        %v2061 = vadd.f32 %v1772, %v2060
        %v2062 = vpop.f32.mrb[0].mxu0
        %v2063 = vpop.f32.mrb[0].mxu0
        %v2064 = vadd.f32 %v1772, %v2063
        %v2065 = vpop.f32.mrb[0].mxu0
        %2066 = vmatprep.mubr.bf16.mxu0 0
        %2067 = vmatmul.mubr.bf16.gmra.mrb[0].mxu0 %v1844
        %v2068 = vpop.f32.mrb[0].mxu0
        %v2069 = vadd.f32 %v1772, %v2068
        %v2070 = vpop.f32.mrb[0].mxu0
        %v2071 = vpop.f32.mrb[0].mxu0
        %v2072 = vadd.f32 %v1772, %v2071
        %v2073 = vpop.f32.mrb[0].mxu0
        %2074 = vmatprep.mubr.bf16.mxu0 0
        %2075 = vmatmul.mubr.bf16.gmra.mrb[0].mxu0 %v1847
        %v2076 = vpop.f32.mrb[0].mxu0
        %v2077 = vadd.f32 %v1772, %v2076
        %v2078 = vpop.f32.mrb[0].mxu0
        %v2079 = vpop.f32.mrb[0].mxu0
        %v2080 = vadd.f32 %v1772, %v2079
        %v2081 = vpop.f32.mrb[0].mxu0
        %2082 = vmatprep.mubr.bf16.mxu0 0
        %2083 = vmatmul.mubr.bf16.gmra.mrb[0].mxu0 %v1850
        %v2084 = vpop.f32.mrb[0].mxu0
        %v2085 = vadd.f32 %v1772, %v2084
        %v2086 = vpop.f32.mrb[0].mxu0
        %v2087 = vpop.f32.mrb[0].mxu0
        %v2088 = vadd.f32 %v1772, %v2087
        %v2089 = vpop.f32.mrb[0].mxu0
        %2090 = vmatprep.mubr.bf16.mxu0 0
        %2091 = vmatmul.mubr.bf16.gmra.mrb[0].mxu0 %v1853
        %v2092 = vpop.f32.mrb[0].mxu0
        %v2093 = vadd.f32 %v1772, %v2092
        %v2094 = vpop.f32.mrb[0].mxu0
        %v2095 = vpop.f32.mrb[0].mxu0
        %v2096 = vadd.f32 %v1772, %v2095
        %v2097 = vpop.f32.mrb[0].mxu0
        %2098 = vmatprep.mubr.bf16.mxu0 0
        %2099 = vmatmul.mubr.bf16.gmra.mrb[0].mxu0 %v1856
        %v2100 = vpop.f32.mrb[0].mxu0
        %v2101 = vadd.f32 %v1772, %v2100
        %v2102 = vpop.f32.mrb[0].mxu0
        %v2103 = vpop.f32.mrb[0].mxu0
        %v2104 = vadd.f32 %v1772, %v2103
        %v2105 = vpop.f32.mrb[0].mxu0
        %2106 = vmatprep.mubr.bf16.mxu0 0
        %2107 = vmatmul.mubr.bf16.gmra.mrb[0].mxu0 %v1859
        %v2108 = vpop.f32.mrb[0].mxu0
        %v2109 = vadd.f32 %v1772, %v2108
        %v2110 = vpop.f32.mrb[0].mxu0
        %v2111 = vpop.f32.mrb[0].mxu0
        %v2112 = vadd.f32 %v1772, %v2111
        %v2113 = vpop.f32.mrb[0].mxu0
        %2114 = vmatprep.mubr.bf16.mxu0 0
        %2115 = vmatmul.mubr.bf16.gmra.mrb[0].mxu0 %v1862
        %v2116 = vpop.f32.mrb[0].mxu0
        %v2117 = vadd.f32 %v1772, %v2116
        %v2118 = vpop.f32.mrb[0].mxu0
        %v2119 = vpop.f32.mrb[0].mxu0
        %v2120 = vadd.f32 %v1772, %v2119
        %v2121 = vpop.f32.mrb[0].mxu0
        %2122 = vmatprep.mubr.bf16.mxu0 0
        %2123 = vmatmul.mubr.bf16.gmra.mrb[0].mxu0 %v1865
        %v2124 = vpop.f32.mrb[0].mxu0
        %v2125 = vadd.f32 %v1772, %v2124
        %v2126 = vpop.f32.mrb[0].mxu0
        %v2127 = vpop.f32.mrb[0].mxu0
        %v2128 = vadd.f32 %v1772, %v2127
        %v2129 = vpop.f32.mrb[0].mxu0
        %2130 = vmatprep.mubr.bf16.mxu0 0
        %2131 = vmatmul.mubr.bf16.gmra.mrb[0].mxu0 %v1868
        %v2132 = vpop.f32.mrb[0].mxu0
        %v2133 = vadd.f32 %v1772, %v2132
        %v2134 = vpop.f32.mrb[0].mxu0
        %v2135 = vpop.f32.mrb[0].mxu0
        %v2136 = vadd.f32 %v1772, %v2135
        %v2137 = vpop.f32.mrb[0].mxu0
        %2138 = vmatprep.mubr.bf16.mxu0 0
        %2139 = vmatmul.mubr.bf16.gmra.mrb[0].mxu0 %v1871
        %v2140 = vpop.f32.mrb[0].mxu0
        %v2141 = vadd.f32 %v1772, %v2140
        %v2142 = vpop.f32.mrb[0].mxu0
        %v2143 = vpop.f32.mrb[0].mxu0
        %v2144 = vadd.f32 %v1772, %v2143
        %v2145 = vpop.f32.mrb[0].mxu0
        %2146 = vmatprep.mubr.bf16.mxu0 0
        %2147 = vmatmul.mubr.bf16.gmra.mrb[0].mxu0 %v1874
        %v2148 = vpop.f32.mrb[0].mxu0
        %v2149 = vadd.f32 %v1772, %v2148
        %v2150 = vpop.f32.mrb[0].mxu0
        %v2151 = vpop.f32.mrb[0].mxu0
        %v2152 = vadd.f32 %v1772, %v2151
        %v2153 = vpop.f32.mrb[0].mxu0
        %2154 = vmatprep.mubr.bf16.mxu0 0
        %2155 = vmatmul.mubr.bf16.gmra.mrb[0].mxu0 %v1877
        %v2156 = vpop.f32.mrb[0].mxu0
        %v2157 = vadd.f32 %v1772, %v2156
        %v2158 = vpop.f32.mrb[0].mxu0
        %v2159 = vpop.f32.mrb[0].mxu0
        %v2160 = vadd.f32 %v1772, %v2159
        %v2161 = vpop.f32.mrb[0].mxu0
        %2162 = vmatprep.mubr.bf16.mxu0 0
        %2163 = vmatmul.mubr.bf16.gmra.mrb[0].mxu0 %v1880
        %v2164 = vpop.f32.mrb[0].mxu0
        %v2165 = vadd.f32 %v1772, %v2164
        %v2166 = vpop.f32.mrb[0].mxu0
        %v2167 = vpop.f32.mrb[0].mxu0
        %v2168 = vadd.f32 %v1772, %v2167
        %v2169 = vpop.f32.mrb[0].mxu0
        %2170 = vdwg.mxu0
        %v2171 = vmax.f32 %v1917, 0.0
        %v2172 = vmax.f32 %v1920, 0.0
        %v2173 = vmax.f32 %v1925, 0.0
        %v2174 = vmax.f32 %v1928, 0.0
        %v2175 = vmax.f32 %v1933, 0.0
        %v2176 = vmax.f32 %v1936, 0.0
        %v2177 = vmax.f32 %v1941, 0.0
        %v2178 = vmax.f32 %v1944, 0.0
        %v2179 = vmax.f32 %v1949, 0.0
        %v2180 = vmax.f32 %v1952, 0.0
        %v2181 = vmax.f32 %v1957, 0.0
        %v2182 = vmax.f32 %v1960, 0.0
        %v2183 = vmax.f32 %v1965, 0.0
        %v2184 = vmax.f32 %v1968, 0.0
        %v2185 = vmax.f32 %v1973, 0.0
        %v2186 = vmax.f32 %v1976, 0.0
        %v2187 = vmax.f32 %v1981, 0.0
        %v2188 = vmax.f32 %v1984, 0.0
        %v2189 = vmax.f32 %v1989, 0.0
        %v2190 = vmax.f32 %v1992, 0.0
        %v2191 = vmax.f32 %v1997, 0.0
        %v2192 = vmax.f32 %v2000, 0.0
        %v2193 = vmax.f32 %v2005, 0.0
        %v2194 = vmax.f32 %v2008, 0.0
        %v2195 = vmax.f32 %v2013, 0.0
        %v2196 = vmax.f32 %v2016, 0.0
        %v2197 = vmax.f32 %v2021, 0.0
        %v2198 = vmax.f32 %v2024, 0.0
        %v2199 = vmax.f32 %v2029, 0.0
        %v2200 = vmax.f32 %v2032, 0.0
        %v2201 = vmax.f32 %v2037, 0.0
        %v2202 = vmax.f32 %v2040, 0.0
        %v2203 = vmax.f32 %v2045, 0.0
        %v2204 = vmax.f32 %v2048, 0.0
        %v2205 = vmax.f32 %v2053, 0.0
        %v2206 = vmax.f32 %v2056, 0.0
        %v2207 = vmax.f32 %v2061, 0.0
        %v2208 = vmax.f32 %v2064, 0.0
        %v2209 = vmax.f32 %v2069, 0.0
        %v2210 = vmax.f32 %v2072, 0.0
        %v2211 = vmax.f32 %v2077, 0.0
        %v2212 = vmax.f32 %v2080, 0.0
        %v2213 = vmax.f32 %v2085, 0.0
        %v2214 = vmax.f32 %v2088, 0.0
        %v2215 = vmax.f32 %v2093, 0.0
        %v2216 = vmax.f32 %v2096, 0.0
        %v2217 = vmax.f32 %v2101, 0.0
        %v2218 = vmax.f32 %v2104, 0.0
        %v2219 = vmax.f32 %v2109, 0.0
        %v2220 = vmax.f32 %v2112, 0.0
        %v2221 = vmax.f32 %v2117, 0.0
        %v2222 = vmax.f32 %v2120, 0.0
        %v2223 = vmax.f32 %v2125, 0.0
        %v2224 = vmax.f32 %v2128, 0.0
        %v2225 = vmax.f32 %v2133, 0.0
        %v2226 = vmax.f32 %v2136, 0.0
        %v2227 = vmax.f32 %v2141, 0.0
        %v2228 = vmax.f32 %v2144, 0.0
        %v2229 = vmax.f32 %v2149, 0.0
        %v2230 = vmax.f32 %v2152, 0.0
        %v2231 = vmax.f32 %v2157, 0.0
        %v2232 = vmax.f32 %v2160, 0.0
        %v2233 = vmax.f32 %v2165, 0.0
        %v2234 = vmax.f32 %v2168, 0.0
        %v2235 = vand.u32 2147483647, %v1917
        %v2236 = vand.u32 2147483647, %v1920
        %v2237 = vand.u32 2147483647, %v1925
        %v2238 = vand.u32 2147483647, %v1928
        %v2239 = vand.u32 2147483647, %v1933
        %v2240 = vand.u32 2147483647, %v1936
        %v2241 = vand.u32 2147483647, %v1941
        %v2242 = vand.u32 2147483647, %v1944
        %v2243 = vand.u32 2147483647, %v1949
        %v2244 = vand.u32 2147483647, %v1952
        %v2245 = vand.u32 2147483647, %v1957
        %v2246 = vand.u32 2147483647, %v1960
        %v2247 = vand.u32 2147483647, %v1965
        %v2248 = vand.u32 2147483647, %v1968
        %v2249 = vand.u32 2147483647, %v1973
        %v2250 = vand.u32 2147483647, %v1976
        %v2251 = vand.u32 2147483647, %v1981
        %v2252 = vand.u32 2147483647, %v1984
        %v2253 = vand.u32 2147483647, %v1989
        %v2254 = vand.u32 2147483647, %v1992
        %v2255 = vand.u32 2147483647, %v1997
        %v2256 = vand.u32 2147483647, %v2000
        %v2257 = vand.u32 2147483647, %v2005
        %v2258 = vand.u32 2147483647, %v2008
        %v2259 = vand.u32 2147483647, %v2013
        %v2260 = vand.u32 2147483647, %v2016
        %v2261 = vand.u32 2147483647, %v2021
        %v2262 = vand.u32 2147483647, %v2024
        %v2263 = vand.u32 2147483647, %v2029
        %v2264 = vand.u32 2147483647, %v2032
        %v2265 = vand.u32 2147483647, %v2037
        %v2266 = vand.u32 2147483647, %v2040
        %v2267 = vand.u32 2147483647, %v2045
        %v2268 = vand.u32 2147483647, %v2048
        %v2269 = vand.u32 2147483647, %v2053
        %v2270 = vand.u32 2147483647, %v2056
        %v2271 = vand.u32 2147483647, %v2061
        %v2272 = vand.u32 2147483647, %v2064
        %v2273 = vand.u32 2147483647, %v2069
        %v2274 = vand.u32 2147483647, %v2072
        %v2275 = vand.u32 2147483647, %v2077
        %v2276 = vand.u32 2147483647, %v2080
        %v2277 = vand.u32 2147483647, %v2085
        %v2278 = vand.u32 2147483647, %v2088
        %v2279 = vand.u32 2147483647, %v2093
        %v2280 = vand.u32 2147483647, %v2096
        %v2281 = vand.u32 2147483647, %v2101
        %v2282 = vand.u32 2147483647, %v2104
        %v2283 = vand.u32 2147483647, %v2109
        %v2284 = vand.u32 2147483647, %v2112
        %v2285 = vand.u32 2147483647, %v2117
        %v2286 = vand.u32 2147483647, %v2120
        %v2287 = vand.u32 2147483647, %v2125
        %v2288 = vand.u32 2147483647, %v2128
        %v2289 = vand.u32 2147483647, %v2133
        %v2290 = vand.u32 2147483647, %v2136
        %v2291 = vand.u32 2147483647, %v2141
        %v2292 = vand.u32 2147483647, %v2144
        %v2293 = vand.u32 2147483647, %v2149
        %v2294 = vand.u32 2147483647, %v2152
        %v2295 = vand.u32 2147483647, %v2157
        %v2296 = vand.u32 2147483647, %v2160
        %v2297 = vand.u32 2147483647, %v2165
        %v2298 = vand.u32 2147483647, %v2168
        %v2299 = vsub.f32 0.0, %v2235
        %v2300 = vsub.f32 0.0, %v2236
        %v2301 = vsub.f32 0.0, %v2237
        %v2302 = vsub.f32 0.0, %v2238
        %v2303 = vsub.f32 0.0, %v2239
        %v2304 = vsub.f32 0.0, %v2240
        %v2305 = vsub.f32 0.0, %v2241
        %v2306 = vsub.f32 0.0, %v2242
        %v2307 = vsub.f32 0.0, %v2243
        %v2308 = vsub.f32 0.0, %v2244
        %v2309 = vsub.f32 0.0, %v2245
        %v2310 = vsub.f32 0.0, %v2246
        %v2311 = vsub.f32 0.0, %v2247
        %v2312 = vsub.f32 0.0, %v2248
        %v2313 = vsub.f32 0.0, %v2249
        %v2314 = vsub.f32 0.0, %v2250
        %v2315 = vsub.f32 0.0, %v2251
        %v2316 = vsub.f32 0.0, %v2252
        %v2317 = vsub.f32 0.0, %v2253
        %v2318 = vsub.f32 0.0, %v2254
        %v2319 = vsub.f32 0.0, %v2255
        %v2320 = vsub.f32 0.0, %v2256
        %v2321 = vsub.f32 0.0, %v2257
        %v2322 = vsub.f32 0.0, %v2258
        %v2323 = vsub.f32 0.0, %v2259
        %v2324 = vsub.f32 0.0, %v2260
        %v2325 = vsub.f32 0.0, %v2261
        %v2326 = vsub.f32 0.0, %v2262
        %v2327 = vsub.f32 0.0, %v2263
        %v2328 = vsub.f32 0.0, %v2264
        %v2329 = vsub.f32 0.0, %v2265
        %v2330 = vsub.f32 0.0, %v2266
        %v2331 = vsub.f32 0.0, %v2267
        %v2332 = vsub.f32 0.0, %v2268
        %v2333 = vsub.f32 0.0, %v2269
        %v2334 = vsub.f32 0.0, %v2270
        %v2335 = vsub.f32 0.0, %v2271
        %v2336 = vsub.f32 0.0, %v2272
        %v2337 = vsub.f32 0.0, %v2273
        %v2338 = vsub.f32 0.0, %v2274
        %v2339 = vsub.f32 0.0, %v2275
        %v2340 = vsub.f32 0.0, %v2276
        %v2341 = vsub.f32 0.0, %v2277
        %v2342 = vsub.f32 0.0, %v2278
        %v2343 = vsub.f32 0.0, %v2279
        %v2344 = vsub.f32 0.0, %v2280
        %v2345 = vsub.f32 0.0, %v2281
        %v2346 = vsub.f32 0.0, %v2282
        %v2347 = vsub.f32 0.0, %v2283
        %v2348 = vsub.f32 0.0, %v2284
        %v2349 = vsub.f32 0.0, %v2285
        %v2350 = vsub.f32 0.0, %v2286
        %v2351 = vsub.f32 0.0, %v2287
        %v2352 = vsub.f32 0.0, %v2288
        %v2353 = vsub.f32 0.0, %v2289
        %v2354 = vsub.f32 0.0, %v2290
        %v2355 = vsub.f32 0.0, %v2291
        %v2356 = vsub.f32 0.0, %v2292
        %v2357 = vsub.f32 0.0, %v2293
        %v2358 = vsub.f32 0.0, %v2294
        %v2359 = vsub.f32 0.0, %v2295
        %v2360 = vsub.f32 0.0, %v2296
        %v2361 = vsub.f32 0.0, %v2297
        %v2362 = vsub.f32 0.0, %v2298
        %v2363 = vmul.f32 %v2299, 1.442695
        %v2364 = vpow.pop %v2363
        %v2365 = vmul.f32 %v2300, 1.442695
        %v2366 = vpow.pop %v2365
        %v2367 = vmul.f32 %v2301, 1.442695
        %v2368 = vpow.pop %v2367
        %v2369 = vmul.f32 %v2302, 1.442695
        %v2370 = vpow.pop %v2369
        %v2371 = vmul.f32 %v2303, 1.442695
        %v2372 = vpow.pop %v2371
        %v2373 = vmul.f32 %v2304, 1.442695
        %v2374 = vpow.pop %v2373
        %v2375 = vmul.f32 %v2305, 1.442695
        %v2376 = vpow.pop %v2375
        %v2377 = vmul.f32 %v2306, 1.442695
        %v2378 = vpow.pop %v2377
        %v2379 = vmul.f32 %v2307, 1.442695
        %v2380 = vpow.pop %v2379
        %v2381 = vmul.f32 %v2308, 1.442695
        %v2382 = vpow.pop %v2381
        %v2383 = vmul.f32 %v2309, 1.442695
        %v2384 = vpow.pop %v2383
        %v2385 = vmul.f32 %v2310, 1.442695
        %v2386 = vpow.pop %v2385
        %v2387 = vmul.f32 %v2311, 1.442695
        %v2388 = vpow.pop %v2387
        %v2389 = vmul.f32 %v2312, 1.442695
        %v2390 = vpow.pop %v2389
        %v2391 = vmul.f32 %v2313, 1.442695
        %v2392 = vpow.pop %v2391
        %v2393 = vmul.f32 %v2314, 1.442695
        %v2394 = vpow.pop %v2393
        %v2395 = vmul.f32 %v2315, 1.442695
        %v2396 = vpow.pop %v2395
        %v2397 = vmul.f32 %v2316, 1.442695
        %v2398 = vpow.pop %v2397
        %v2399 = vmul.f32 %v2317, 1.442695
        %v2400 = vpow.pop %v2399
        %v2401 = vmul.f32 %v2318, 1.442695
        %v2402 = vpow.pop %v2401
        %v2403 = vmul.f32 %v2319, 1.442695
        %v2404 = vpow.pop %v2403
        %v2405 = vmul.f32 %v2320, 1.442695
        %v2406 = vpow.pop %v2405
        %v2407 = vmul.f32 %v2321, 1.442695
        %v2408 = vpow.pop %v2407
        %v2409 = vmul.f32 %v2322, 1.442695
        %v2410 = vpow.pop %v2409
        %v2411 = vmul.f32 %v2323, 1.442695
        %v2412 = vpow.pop %v2411
        %v2413 = vmul.f32 %v2324, 1.442695
        %v2414 = vpow.pop %v2413
        %v2415 = vmul.f32 %v2325, 1.442695
        %v2416 = vpow.pop %v2415
        %v2417 = vmul.f32 %v2326, 1.442695
        %v2418 = vpow.pop %v2417
        %v2419 = vmul.f32 %v2327, 1.442695
        %v2420 = vpow.pop %v2419
        %v2421 = vmul.f32 %v2328, 1.442695
        %v2422 = vpow.pop %v2421
        %v2423 = vmul.f32 %v2329, 1.442695
        %v2424 = vpow.pop %v2423
        %v2425 = vmul.f32 %v2330, 1.442695
        %v2426 = vpow.pop %v2425
        %v2427 = vmul.f32 %v2331, 1.442695
        %v2428 = vpow.pop %v2427
        %v2429 = vmul.f32 %v2332, 1.442695
        %v2430 = vpow.pop %v2429
        %v2431 = vmul.f32 %v2333, 1.442695
        %v2432 = vpow.pop %v2431
        %v2433 = vmul.f32 %v2334, 1.442695
        %v2434 = vpow.pop %v2433
        %v2435 = vmul.f32 %v2335, 1.442695
        %v2436 = vpow.pop %v2435
        %v2437 = vmul.f32 %v2336, 1.442695
        %v2438 = vpow.pop %v2437
        %v2439 = vmul.f32 %v2337, 1.442695
        %v2440 = vpow.pop %v2439
        %v2441 = vmul.f32 %v2338, 1.442695
        %v2442 = vpow.pop %v2441
        %v2443 = vmul.f32 %v2339, 1.442695
        %v2444 = vpow.pop %v2443
        %v2445 = vmul.f32 %v2340, 1.442695
        %v2446 = vpow.pop %v2445
        %v2447 = vmul.f32 %v2341, 1.442695
        %v2448 = vpow.pop %v2447
        %v2449 = vmul.f32 %v2342, 1.442695
        %v2450 = vpow.pop %v2449
        %v2451 = vmul.f32 %v2343, 1.442695
        %v2452 = vpow.pop %v2451
        %v2453 = vmul.f32 %v2344, 1.442695
        %v2454 = vpow.pop %v2453
        %v2455 = vmul.f32 %v2345, 1.442695
        %v2456 = vpow.pop %v2455
        %v2457 = vmul.f32 %v2346, 1.442695
        %v2458 = vpow.pop %v2457
        %v2459 = vmul.f32 %v2347, 1.442695
        %v2460 = vpow.pop %v2459
        %v2461 = vmul.f32 %v2348, 1.442695
        %v2462 = vpow.pop %v2461
        %v2463 = vmul.f32 %v2349, 1.442695
        %v2464 = vpow.pop %v2463
        %v2465 = vmul.f32 %v2350, 1.442695
        %v2466 = vpow.pop %v2465
        %v2467 = vmul.f32 %v2351, 1.442695
        %v2468 = vpow.pop %v2467
        %v2469 = vmul.f32 %v2352, 1.442695
        %v2470 = vpow.pop %v2469
        %v2471 = vmul.f32 %v2353, 1.442695
        %v2472 = vpow.pop %v2471
        %v2473 = vmul.f32 %v2354, 1.442695
        %v2474 = vpow.pop %v2473
        %v2475 = vmul.f32 %v2355, 1.442695
        %v2476 = vpow.pop %v2475
        %v2477 = vmul.f32 %v2356, 1.442695
        %v2478 = vpow.pop %v2477
        %v2479 = vmul.f32 %v2357, 1.442695
        %v2480 = vpow.pop %v2479
        %v2481 = vmul.f32 %v2358, 1.442695
        %v2482 = vpow.pop %v2481
        %v2483 = vmul.f32 %v2359, 1.442695
        %v2484 = vpow.pop %v2483
        %v2485 = vmul.f32 %v2360, 1.442695
        %v2486 = vpow.pop %v2485
        %v2487 = vmul.f32 %v2361, 1.442695
        %v2488 = vpow.pop %v2487
        %v2489 = vmul.f32 %v2362, 1.442695
        %v2490 = vpow.pop %v2489
        %v2491 = vadd.f32 %v2364, 1.0
        %v2492 = vadd.f32 %v2366, 1.0
        %v2493 = vadd.f32 %v2368, 1.0
        %v2494 = vadd.f32 %v2370, 1.0
        %v2495 = vadd.f32 %v2372, 1.0
        %v2496 = vadd.f32 %v2374, 1.0
        %v2497 = vadd.f32 %v2376, 1.0
        %v2498 = vadd.f32 %v2378, 1.0
        %v2499 = vadd.f32 %v2380, 1.0
        %v2500 = vadd.f32 %v2382, 1.0
        %v2501 = vadd.f32 %v2384, 1.0
        %v2502 = vadd.f32 %v2386, 1.0
        %v2503 = vadd.f32 %v2388, 1.0
        %v2504 = vadd.f32 %v2390, 1.0
        %v2505 = vadd.f32 %v2392, 1.0
        %v2506 = vadd.f32 %v2394, 1.0
        %v2507 = vadd.f32 %v2396, 1.0
        %v2508 = vadd.f32 %v2398, 1.0
        %v2509 = vadd.f32 %v2400, 1.0
        %v2510 = vadd.f32 %v2402, 1.0
        %v2511 = vadd.f32 %v2404, 1.0
        %v2512 = vadd.f32 %v2406, 1.0
        %v2513 = vadd.f32 %v2408, 1.0
        %v2514 = vadd.f32 %v2410, 1.0
        %v2515 = vadd.f32 %v2412, 1.0
        %v2516 = vadd.f32 %v2414, 1.0
        %v2517 = vadd.f32 %v2416, 1.0
        %v2518 = vadd.f32 %v2418, 1.0
        %v2519 = vadd.f32 %v2420, 1.0
        %v2520 = vadd.f32 %v2422, 1.0
        %v2521 = vadd.f32 %v2424, 1.0
        %v2522 = vadd.f32 %v2426, 1.0
        %v2523 = vadd.f32 %v2428, 1.0
        %v2524 = vadd.f32 %v2430, 1.0
        %v2525 = vadd.f32 %v2432, 1.0
        %v2526 = vadd.f32 %v2434, 1.0
        %v2527 = vadd.f32 %v2436, 1.0
        %v2528 = vadd.f32 %v2438, 1.0
        %v2529 = vadd.f32 %v2440, 1.0
        %v2530 = vadd.f32 %v2442, 1.0
        %v2531 = vadd.f32 %v2444, 1.0
        %v2532 = vadd.f32 %v2446, 1.0
        %v2533 = vadd.f32 %v2448, 1.0
        %v2534 = vadd.f32 %v2450, 1.0
        %v2535 = vadd.f32 %v2452, 1.0
        %v2536 = vadd.f32 %v2454, 1.0
        %v2537 = vadd.f32 %v2456, 1.0
        %v2538 = vadd.f32 %v2458, 1.0
        %v2539 = vadd.f32 %v2460, 1.0
        %v2540 = vadd.f32 %v2462, 1.0
        %v2541 = vadd.f32 %v2464, 1.0
        %v2542 = vadd.f32 %v2466, 1.0
        %v2543 = vadd.f32 %v2468, 1.0
        %v2544 = vadd.f32 %v2470, 1.0
        %v2545 = vadd.f32 %v2472, 1.0
        %v2546 = vadd.f32 %v2474, 1.0
        %v2547 = vadd.f32 %v2476, 1.0
        %v2548 = vadd.f32 %v2478, 1.0
        %v2549 = vadd.f32 %v2480, 1.0
        %v2550 = vadd.f32 %v2482, 1.0
        %v2551 = vadd.f32 %v2484, 1.0
        %v2552 = vadd.f32 %v2486, 1.0
        %v2553 = vadd.f32 %v2488, 1.0
        %v2554 = vadd.f32 %v2490, 1.0
        %v2555 = vlog2.pop %v2491
        %v2556 = vmul.f32 %v2555, 0.6931472
        %v2557 = vlog2.pop %v2492
        %v2558 = vmul.f32 %v2557, 0.6931472
        %v2559 = vlog2.pop %v2493
        %v2560 = vmul.f32 %v2559, 0.6931472
        %v2561 = vlog2.pop %v2494
        %v2562 = vmul.f32 %v2561, 0.6931472
        %v2563 = vlog2.pop %v2495
        %v2564 = vmul.f32 %v2563, 0.6931472
        %v2565 = vlog2.pop %v2496
        %v2566 = vmul.f32 %v2565, 0.6931472
        %v2567 = vlog2.pop %v2497
        %v2568 = vmul.f32 %v2567, 0.6931472
        %v2569 = vlog2.pop %v2498
        %v2570 = vmul.f32 %v2569, 0.6931472
        %v2571 = vlog2.pop %v2499
        %v2572 = vmul.f32 %v2571, 0.6931472
        %v2573 = vlog2.pop %v2500
        %v2574 = vmul.f32 %v2573, 0.6931472
        %v2575 = vlog2.pop %v2501
        %v2576 = vmul.f32 %v2575, 0.6931472
        %v2577 = vlog2.pop %v2502
        %v2578 = vmul.f32 %v2577, 0.6931472
        %v2579 = vlog2.pop %v2503
        %v2580 = vmul.f32 %v2579, 0.6931472
        %v2581 = vlog2.pop %v2504
        %v2582 = vmul.f32 %v2581, 0.6931472
        %v2583 = vlog2.pop %v2505
        %v2584 = vmul.f32 %v2583, 0.6931472
        %v2585 = vlog2.pop %v2506
        %v2586 = vmul.f32 %v2585, 0.6931472
        %v2587 = vlog2.pop %v2507
        %v2588 = vmul.f32 %v2587, 0.6931472
        %v2589 = vlog2.pop %v2508
        %v2590 = vmul.f32 %v2589, 0.6931472
        %v2591 = vlog2.pop %v2509
        %v2592 = vmul.f32 %v2591, 0.6931472
        %v2593 = vlog2.pop %v2510
        %v2594 = vmul.f32 %v2593, 0.6931472
        %v2595 = vlog2.pop %v2511
        %v2596 = vmul.f32 %v2595, 0.6931472
        %v2597 = vlog2.pop %v2512
        %v2598 = vmul.f32 %v2597, 0.6931472
        %v2599 = vlog2.pop %v2513
        %v2600 = vmul.f32 %v2599, 0.6931472
        %v2601 = vlog2.pop %v2514
        %v2602 = vmul.f32 %v2601, 0.6931472
        %v2603 = vlog2.pop %v2515
        %v2604 = vmul.f32 %v2603, 0.6931472
        %v2605 = vlog2.pop %v2516
        %v2606 = vmul.f32 %v2605, 0.6931472
        %v2607 = vlog2.pop %v2517
        %v2608 = vmul.f32 %v2607, 0.6931472
        %v2609 = vlog2.pop %v2518
        %v2610 = vmul.f32 %v2609, 0.6931472
        %v2611 = vlog2.pop %v2519
        %v2612 = vmul.f32 %v2611, 0.6931472
        %v2613 = vlog2.pop %v2520
        %v2614 = vmul.f32 %v2613, 0.6931472
        %v2615 = vlog2.pop %v2521
        %v2616 = vmul.f32 %v2615, 0.6931472
        %v2617 = vlog2.pop %v2522
        %v2618 = vmul.f32 %v2617, 0.6931472
        %v2619 = vlog2.pop %v2523
        %v2620 = vmul.f32 %v2619, 0.6931472
        %v2621 = vlog2.pop %v2524
        %v2622 = vmul.f32 %v2621, 0.6931472
        %v2623 = vlog2.pop %v2525
        %v2624 = vmul.f32 %v2623, 0.6931472
        %v2625 = vlog2.pop %v2526
        %v2626 = vmul.f32 %v2625, 0.6931472
        %v2627 = vlog2.pop %v2527
        %v2628 = vmul.f32 %v2627, 0.6931472
        %v2629 = vlog2.pop %v2528
        %v2630 = vmul.f32 %v2629, 0.6931472
        %v2631 = vlog2.pop %v2529
        %v2632 = vmul.f32 %v2631, 0.6931472
        %v2633 = vlog2.pop %v2530
        %v2634 = vmul.f32 %v2633, 0.6931472
        %v2635 = vlog2.pop %v2531
        %v2636 = vmul.f32 %v2635, 0.6931472
        %v2637 = vlog2.pop %v2532
        %v2638 = vmul.f32 %v2637, 0.6931472
        %v2639 = vlog2.pop %v2533
        %v2640 = vmul.f32 %v2639, 0.6931472
        %v2641 = vlog2.pop %v2534
        %v2642 = vmul.f32 %v2641, 0.6931472
        %v2643 = vlog2.pop %v2535
        %v2644 = vmul.f32 %v2643, 0.6931472
        %v2645 = vlog2.pop %v2536
        %v2646 = vmul.f32 %v2645, 0.6931472
        %v2647 = vlog2.pop %v2537
        %v2648 = vmul.f32 %v2647, 0.6931472
        %v2649 = vlog2.pop %v2538
        %v2650 = vmul.f32 %v2649, 0.6931472
        %v2651 = vlog2.pop %v2539
        %v2652 = vmul.f32 %v2651, 0.6931472
        %v2653 = vlog2.pop %v2540
        %v2654 = vmul.f32 %v2653, 0.6931472
        %v2655 = vlog2.pop %v2541
        %v2656 = vmul.f32 %v2655, 0.6931472
        %v2657 = vlog2.pop %v2542
        %v2658 = vmul.f32 %v2657, 0.6931472
        %v2659 = vlog2.pop %v2543
        %v2660 = vmul.f32 %v2659, 0.6931472
        %v2661 = vlog2.pop %v2544
        %v2662 = vmul.f32 %v2661, 0.6931472
        %v2663 = vlog2.pop %v2545
        %v2664 = vmul.f32 %v2663, 0.6931472
        %v2665 = vlog2.pop %v2546
        %v2666 = vmul.f32 %v2665, 0.6931472
        %v2667 = vlog2.pop %v2547
        %v2668 = vmul.f32 %v2667, 0.6931472
        %v2669 = vlog2.pop %v2548
        %v2670 = vmul.f32 %v2669, 0.6931472
        %v2671 = vlog2.pop %v2549
        %v2672 = vmul.f32 %v2671, 0.6931472
        %v2673 = vlog2.pop %v2550
        %v2674 = vmul.f32 %v2673, 0.6931472
        %v2675 = vlog2.pop %v2551
        %v2676 = vmul.f32 %v2675, 0.6931472
        %v2677 = vlog2.pop %v2552
        %v2678 = vmul.f32 %v2677, 0.6931472
        %v2679 = vlog2.pop %v2553
        %v2680 = vmul.f32 %v2679, 0.6931472
        %v2681 = vlog2.pop %v2554
        %v2682 = vmul.f32 %v2681, 0.6931472
        %v2683 = vadd.f32 %v2171, %v2556
        %v2684 = vadd.f32 %v2172, %v2558
        %v2685 = vadd.f32 %v2173, %v2560
        %v2686 = vadd.f32 %v2174, %v2562
        %v2687 = vadd.f32 %v2175, %v2564
        %v2688 = vadd.f32 %v2176, %v2566
        %v2689 = vadd.f32 %v2177, %v2568
        %v2690 = vadd.f32 %v2178, %v2570
        %v2691 = vadd.f32 %v2179, %v2572
        %v2692 = vadd.f32 %v2180, %v2574
        %v2693 = vadd.f32 %v2181, %v2576
        %v2694 = vadd.f32 %v2182, %v2578
        %v2695 = vadd.f32 %v2183, %v2580
        %v2696 = vadd.f32 %v2184, %v2582
        %v2697 = vadd.f32 %v2185, %v2584
        %v2698 = vadd.f32 %v2186, %v2586
        %v2699 = vadd.f32 %v2187, %v2588
        %v2700 = vadd.f32 %v2188, %v2590
        %v2701 = vadd.f32 %v2189, %v2592
        %v2702 = vadd.f32 %v2190, %v2594
        %v2703 = vadd.f32 %v2191, %v2596
        %v2704 = vadd.f32 %v2192, %v2598
        %v2705 = vadd.f32 %v2193, %v2600
        %v2706 = vadd.f32 %v2194, %v2602
        %v2707 = vadd.f32 %v2195, %v2604
        %v2708 = vadd.f32 %v2196, %v2606
        %v2709 = vadd.f32 %v2197, %v2608
        %v2710 = vadd.f32 %v2198, %v2610
        %v2711 = vadd.f32 %v2199, %v2612
        %v2712 = vadd.f32 %v2200, %v2614
        %v2713 = vadd.f32 %v2201, %v2616
        %v2714 = vadd.f32 %v2202, %v2618
        %v2715 = vadd.f32 %v2203, %v2620
        %v2716 = vadd.f32 %v2204, %v2622
        %v2717 = vadd.f32 %v2205, %v2624
        %v2718 = vadd.f32 %v2206, %v2626
        %v2719 = vadd.f32 %v2207, %v2628
        %v2720 = vadd.f32 %v2208, %v2630
        %v2721 = vadd.f32 %v2209, %v2632
        %v2722 = vadd.f32 %v2210, %v2634
        %v2723 = vadd.f32 %v2211, %v2636
        %v2724 = vadd.f32 %v2212, %v2638
        %v2725 = vadd.f32 %v2213, %v2640
        %v2726 = vadd.f32 %v2214, %v2642
        %v2727 = vadd.f32 %v2215, %v2644
        %v2728 = vadd.f32 %v2216, %v2646
        %v2729 = vadd.f32 %v2217, %v2648
        %v2730 = vadd.f32 %v2218, %v2650
        %v2731 = vadd.f32 %v2219, %v2652
        %v2732 = vadd.f32 %v2220, %v2654
        %v2733 = vadd.f32 %v2221, %v2656
        %v2734 = vadd.f32 %v2222, %v2658
        %v2735 = vadd.f32 %v2223, %v2660
        %v2736 = vadd.f32 %v2224, %v2662
        %v2737 = vadd.f32 %v2225, %v2664
        %v2738 = vadd.f32 %v2226, %v2666
        %v2739 = vadd.f32 %v2227, %v2668
        %v2740 = vadd.f32 %v2228, %v2670
        %v2741 = vadd.f32 %v2229, %v2672
        %v2742 = vadd.f32 %v2230, %v2674
        %v2743 = vadd.f32 %v2231, %v2676
        %v2744 = vadd.f32 %v2232, %v2678
        %v2745 = vadd.f32 %v2233, %v2680
        %v2746 = vadd.f32 %v2234, %v2682
        %v2747 = vpack.c.bf16 %v2684, %v2683
        %v2748 = vpack.c.bf16 %v2686, %v2685
        %v2749 = vpack.c.bf16 %v2688, %v2687
        %v2750 = vpack.c.bf16 %v2690, %v2689
        %v2751 = vpack.c.bf16 %v2692, %v2691
        %v2752 = vpack.c.bf16 %v2694, %v2693
        %v2753 = vpack.c.bf16 %v2696, %v2695
        %v2754 = vpack.c.bf16 %v2698, %v2697
        %v2755 = vpack.c.bf16 %v2700, %v2699
        %v2756 = vpack.c.bf16 %v2702, %v2701
        %v2757 = vpack.c.bf16 %v2704, %v2703
        %v2758 = vpack.c.bf16 %v2706, %v2705
        %v2759 = vpack.c.bf16 %v2708, %v2707
        %v2760 = vpack.c.bf16 %v2710, %v2709
        %v2761 = vpack.c.bf16 %v2712, %v2711
        %v2762 = vpack.c.bf16 %v2714, %v2713
        %v2763 = vpack.c.bf16 %v2716, %v2715
        %v2764 = vpack.c.bf16 %v2718, %v2717
        %v2765 = vpack.c.bf16 %v2720, %v2719
        %v2766 = vpack.c.bf16 %v2722, %v2721
        %v2767 = vpack.c.bf16 %v2724, %v2723
        %v2768 = vpack.c.bf16 %v2726, %v2725
        %v2769 = vpack.c.bf16 %v2728, %v2727
        %v2770 = vpack.c.bf16 %v2730, %v2729
        %v2771 = vpack.c.bf16 %v2732, %v2731
        %v2772 = vpack.c.bf16 %v2734, %v2733
        %v2773 = vpack.c.bf16 %v2736, %v2735
        %v2774 = vpack.c.bf16 %v2738, %v2737
        %v2775 = vpack.c.bf16 %v2740, %v2739
        %v2776 = vpack.c.bf16 %v2742, %v2741
        %v2777 = vpack.c.bf16 %v2744, %v2743
        %v2778 = vpack.c.bf16 %v2746, %v2745
        %v2811 = vunpack.c.l.b16 %v2747
        %v2812 = vunpack.c.h.b16 %v2747
        %v2813 = vunpack.c.l.b16 %v2748
        %v2814 = vunpack.c.h.b16 %v2748
        %v2815 = vunpack.c.l.b16 %v2749
        %v2816 = vunpack.c.h.b16 %v2749
        %v2817 = vunpack.c.l.b16 %v2750
        %v2818 = vunpack.c.h.b16 %v2750
        %v2819 = vunpack.c.l.b16 %v2751
        %v2820 = vunpack.c.h.b16 %v2751
        %v2821 = vunpack.c.l.b16 %v2752
        %v2822 = vunpack.c.h.b16 %v2752
        %v2823 = vunpack.c.l.b16 %v2753
        %v2824 = vunpack.c.h.b16 %v2753
        %v2825 = vunpack.c.l.b16 %v2754
        %v2826 = vunpack.c.h.b16 %v2754
        %v2827 = vunpack.c.l.b16 %v2755
        %v2828 = vunpack.c.h.b16 %v2755
        %v2829 = vunpack.c.l.b16 %v2756
        %v2830 = vunpack.c.h.b16 %v2756
        %v2831 = vunpack.c.l.b16 %v2757
        %v2832 = vunpack.c.h.b16 %v2757
        %v2833 = vunpack.c.l.b16 %v2758
        %v2834 = vunpack.c.h.b16 %v2758
        %v2835 = vunpack.c.l.b16 %v2759
        %v2836 = vunpack.c.h.b16 %v2759
        %v2837 = vunpack.c.l.b16 %v2760
        %v2838 = vunpack.c.h.b16 %v2760
        %v2839 = vunpack.c.l.b16 %v2761
        %v2840 = vunpack.c.h.b16 %v2761
        %v2841 = vunpack.c.l.b16 %v2762
        %v2842 = vunpack.c.h.b16 %v2762
        %v2843 = vunpack.c.l.b16 %v2763
        %v2844 = vunpack.c.h.b16 %v2763
        %v2845 = vunpack.c.l.b16 %v2764
        %v2846 = vunpack.c.h.b16 %v2764
        %v2847 = vunpack.c.l.b16 %v2765
        %v2848 = vunpack.c.h.b16 %v2765
        %v2849 = vunpack.c.l.b16 %v2766
        %v2850 = vunpack.c.h.b16 %v2766
        %v2851 = vunpack.c.l.b16 %v2767
        %v2852 = vunpack.c.h.b16 %v2767
        %v2853 = vunpack.c.l.b16 %v2768
        %v2854 = vunpack.c.h.b16 %v2768
        %v2855 = vunpack.c.l.b16 %v2769
        %v2856 = vunpack.c.h.b16 %v2769
        %v2857 = vunpack.c.l.b16 %v2770
        %v2858 = vunpack.c.h.b16 %v2770
        %v2859 = vunpack.c.l.b16 %v2771
        %v2860 = vunpack.c.h.b16 %v2771
        %v2861 = vunpack.c.l.b16 %v2772
        %v2862 = vunpack.c.h.b16 %v2772
        %v2863 = vunpack.c.l.b16 %v2773
        %v2864 = vunpack.c.h.b16 %v2773
        %v2865 = vunpack.c.l.b16 %v2774
        %v2866 = vunpack.c.h.b16 %v2774
        %v2867 = vunpack.c.l.b16 %v2775
        %v2868 = vunpack.c.h.b16 %v2775
        %v2869 = vunpack.c.l.b16 %v2776
        %v2870 = vunpack.c.h.b16 %v2776
        %v2871 = vunpack.c.l.b16 %v2777
        %v2872 = vunpack.c.h.b16 %v2777
        %v2873 = vunpack.c.l.b16 %v2778
        %v2874 = vunpack.c.h.b16 %v2778
        %v2875 = vpack.c.b16 %v2811, %v2811
        %v2876 = vpack.c.b16 %v2812, %v2812
        %v2877 = vpack.c.b16 %v2813, %v2813
        %v2878 = vpack.c.b16 %v2814, %v2814
        %v2879 = vpack.c.b16 %v2815, %v2815
        %v2880 = vpack.c.b16 %v2816, %v2816
        %v2881 = vpack.c.b16 %v2817, %v2817
        %v2882 = vpack.c.b16 %v2818, %v2818
        %v2883 = vpack.c.b16 %v2819, %v2819
        %v2884 = vpack.c.b16 %v2820, %v2820
        %v2885 = vpack.c.b16 %v2821, %v2821
        %v2886 = vpack.c.b16 %v2822, %v2822
        %v2887 = vpack.c.b16 %v2823, %v2823
        %v2888 = vpack.c.b16 %v2824, %v2824
        %v2889 = vpack.c.b16 %v2825, %v2825
        %v2890 = vpack.c.b16 %v2826, %v2826
        %v2891 = vpack.c.b16 %v2827, %v2827
        %v2892 = vpack.c.b16 %v2828, %v2828
        %v2893 = vpack.c.b16 %v2829, %v2829
        %v2894 = vpack.c.b16 %v2830, %v2830
        %v2895 = vpack.c.b16 %v2831, %v2831
        %v2896 = vpack.c.b16 %v2832, %v2832
        %v2897 = vpack.c.b16 %v2833, %v2833
        %v2898 = vpack.c.b16 %v2834, %v2834
        %v2899 = vpack.c.b16 %v2835, %v2835
        %v2900 = vpack.c.b16 %v2836, %v2836
        %v2901 = vpack.c.b16 %v2837, %v2837
        %v2902 = vpack.c.b16 %v2838, %v2838
        %v2903 = vpack.c.b16 %v2839, %v2839
        %v2904 = vpack.c.b16 %v2840, %v2840
        %v2905 = vpack.c.b16 %v2841, %v2841
        %v2906 = vpack.c.b16 %v2842, %v2842
        %v2907 = vpack.c.b16 %v2843, %v2843
        %v2908 = vpack.c.b16 %v2844, %v2844
        %v2909 = vpack.c.b16 %v2845, %v2845
        %v2910 = vpack.c.b16 %v2846, %v2846
        %v2911 = vpack.c.b16 %v2847, %v2847
        %v2912 = vpack.c.b16 %v2848, %v2848
        %v2913 = vpack.c.b16 %v2849, %v2849
        %v2914 = vpack.c.b16 %v2850, %v2850
        %v2915 = vpack.c.b16 %v2851, %v2851
        %v2916 = vpack.c.b16 %v2852, %v2852
        %v2917 = vpack.c.b16 %v2853, %v2853
        %v2918 = vpack.c.b16 %v2854, %v2854
        %v2919 = vpack.c.b16 %v2855, %v2855
        %v2920 = vpack.c.b16 %v2856, %v2856
        %v2921 = vpack.c.b16 %v2857, %v2857
        %v2922 = vpack.c.b16 %v2858, %v2858
        %v2923 = vpack.c.b16 %v2859, %v2859
        %v2924 = vpack.c.b16 %v2860, %v2860
        %v2925 = vpack.c.b16 %v2861, %v2861
        %v2926 = vpack.c.b16 %v2862, %v2862
        %v2927 = vpack.c.b16 %v2863, %v2863
        %v2928 = vpack.c.b16 %v2864, %v2864
        %v2929 = vpack.c.b16 %v2865, %v2865
        %v2930 = vpack.c.b16 %v2866, %v2866
        %v2931 = vpack.c.b16 %v2867, %v2867
        %v2932 = vpack.c.b16 %v2868, %v2868
        %v2933 = vpack.c.b16 %v2869, %v2869
        %v2934 = vpack.c.b16 %v2870, %v2870
        %v2935 = vpack.c.b16 %v2871, %v2871
        %v2936 = vpack.c.b16 %v2872, %v2872
        %v2937 = vpack.c.b16 %v2873, %v2873
        %v2938 = vpack.c.b16 %v2874, %v2874
        %3003 = vst [vmem:[%s272] sm:$0xf] %v2875
        %3004 = vst [vmem:[%s272 + $0x4] sm:$0xf] %v2876
        %3005 = vst [vmem:[%s272 + $0x8] sm:$0xf] %v2877
        %3006 = vst [vmem:[%s272 + $0xc] sm:$0xf] %v2878
        %3007 = vst [vmem:[%s272 + $0x10] sm:$0xf] %v2879
        %3008 = vst [vmem:[%s272 + $0x14] sm:$0xf] %v2880
        %3009 = vst [vmem:[%s272 + $0x18] sm:$0xf] %v2881
        %3010 = vst [vmem:[%s272 + $0x1c] sm:$0xf] %v2882
        %3011 = vst [vmem:[%s272 + $0x20] sm:$0xf] %v2883
        %3012 = vst [vmem:[%s272 + $0x24] sm:$0xf] %v2884
        %3013 = vst [vmem:[%s272 + $0x28] sm:$0xf] %v2885
        %3014 = vst [vmem:[%s272 + $0x2c] sm:$0xf] %v2886
        %3015 = vst [vmem:[%s272 + $0x30] sm:$0xf] %v2887
        %3016 = vst [vmem:[%s272 + $0x34] sm:$0xf] %v2888
        %3017 = vst [vmem:[%s272 + $0x38] sm:$0xf] %v2889
        %3018 = vst [vmem:[%s272 + $0x3c] sm:$0xf] %v2890
        %3019 = vst [vmem:[%s272 + $0x40] sm:$0xf] %v2891
        %3020 = vst [vmem:[%s272 + $0x44] sm:$0xf] %v2892
        %3021 = vst [vmem:[%s272 + $0x48] sm:$0xf] %v2893
        %3022 = vst [vmem:[%s272 + $0x4c] sm:$0xf] %v2894
        %3023 = vst [vmem:[%s272 + $0x50] sm:$0xf] %v2895
        %3024 = vst [vmem:[%s272 + $0x54] sm:$0xf] %v2896
        %3025 = vst [vmem:[%s272 + $0x58] sm:$0xf] %v2897
        %3026 = vst [vmem:[%s272 + $0x5c] sm:$0xf] %v2898
        %3027 = vst [vmem:[%s272 + $0x60] sm:$0xf] %v2899
        %3028 = vst [vmem:[%s272 + $0x64] sm:$0xf] %v2900
        %3029 = vst [vmem:[%s272 + $0x68] sm:$0xf] %v2901
        %3030 = vst [vmem:[%s272 + $0x6c] sm:$0xf] %v2902
        %3031 = vst [vmem:[%s272 + $0x70] sm:$0xf] %v2903
        %3032 = vst [vmem:[%s272 + $0x74] sm:$0xf] %v2904
        %3033 = vst [vmem:[%s272 + $0x78] sm:$0xf] %v2905
        %3034 = vst [vmem:[%s272 + $0x7c] sm:$0xf] %v2906
        %3035 = vst [vmem:[%s272 + $0x80] sm:$0xf] %v2907
        %3036 = vst [vmem:[%s272 + $0x84] sm:$0xf] %v2908
        %3037 = vst [vmem:[%s272 + $0x88] sm:$0xf] %v2909
        %3038 = vst [vmem:[%s272 + $0x8c] sm:$0xf] %v2910
        %3039 = vst [vmem:[%s272 + $0x90] sm:$0xf] %v2911
        %3040 = vst [vmem:[%s272 + $0x94] sm:$0xf] %v2912
        %3041 = vst [vmem:[%s272 + $0x98] sm:$0xf] %v2913
        %3042 = vst [vmem:[%s272 + $0x9c] sm:$0xf] %v2914
        %3043 = vst [vmem:[%s272 + $0xa0] sm:$0xf] %v2915
        %3044 = vst [vmem:[%s272 + $0xa4] sm:$0xf] %v2916
        %3045 = vst [vmem:[%s272 + $0xa8] sm:$0xf] %v2917
        %3046 = vst [vmem:[%s272 + $0xac] sm:$0xf] %v2918
        %3047 = vst [vmem:[%s272 + $0xb0] sm:$0xf] %v2919
        %3048 = vst [vmem:[%s272 + $0xb4] sm:$0xf] %v2920
        %3049 = vst [vmem:[%s272 + $0xb8] sm:$0xf] %v2921
        %3050 = vst [vmem:[%s272 + $0xbc] sm:$0xf] %v2922
        %3051 = vst [vmem:[%s272 + $0xc0] sm:$0xf] %v2923
        %3052 = vst [vmem:[%s272 + $0xc4] sm:$0xf] %v2924
        %3053 = vst [vmem:[%s272 + $0xc8] sm:$0xf] %v2925
        %3054 = vst [vmem:[%s272 + $0xcc] sm:$0xf] %v2926
        %3055 = vst [vmem:[%s272 + $0xd0] sm:$0xf] %v2927
        %3056 = vst [vmem:[%s272 + $0xd4] sm:$0xf] %v2928
        %3057 = vst [vmem:[%s272 + $0xd8] sm:$0xf] %v2929
        %3058 = vst [vmem:[%s272 + $0xdc] sm:$0xf] %v2930
        %3059 = vst [vmem:[%s272 + $0xe0] sm:$0xf] %v2931
        %3060 = vst [vmem:[%s272 + $0xe4] sm:$0xf] %v2932
        %3061 = vst [vmem:[%s272 + $0xe8] sm:$0xf] %v2933
        %3062 = vst [vmem:[%s272 + $0xec] sm:$0xf] %v2934
        %3063 = vst [vmem:[%s272 + $0xf0] sm:$0xf] %v2935
        %3064 = vst [vmem:[%s272 + $0xf4] sm:$0xf] %v2936
        %3065 = vst [vmem:[%s272 + $0xf8] sm:$0xf] %v2937
        %3066 = vst [vmem:[%s272 + $0xfc] sm:$0xf] %v2938
        %s3067 = sand.u32 %s181, 1
        %s3068 = scalar_lea.sflag [#allocation3], %s3067
        %s3069 = sand.u32 %s181, 1
        %s3070 = smul.addr %s3069, 256
        %s3071 = scalar_lea.vmem [#allocation2], %s3070
        // Predicated region
        $region49: #{tpu_custom_call.1} parent=47 // pred_check
          %p3072 = pneg %p191
        $region50: #{tpu_custom_call.1} parent=47 // pred_check_branch
          %3074 = sbr.rel (%p3072) target = $region52
        $region51: #{tpu_custom_call.1} parent=47 // pred_region
          %s3075 = smul.u32 64, %s21
          %s3077 = ssub.s32 4096, 4096
          %3078 = vsyncadd %s3068, %s3077
          %s3079 = smul.addr %s3075, 64
          %s3080 = scalar_lea.hbm %s7, %s3079
          %s3081 = sshll.u32 %s3071, 4
          %s3082 = int_to_ptr.vmem [resolvable:$true] %s3081
          %3087 = dma.vmem_to_hbm [thread:$0]  %s3082, 4096, %s3080, %s3068, 64, 64, 4
        $region52: #{tpu_custom_call.1} parent=47 // pred_fallthru
          _
      $region48: #{tpu_custom_call.1} parent=5 // pred_fallthru
        _
      %p3088 = scmp.le.s32.totalorder 2, %s16
      // Predicated region
      $region53: #{tpu_custom_call.1} parent=5 // pred_check
        %p3089 = pneg %p3088
      $region54: #{tpu_custom_call.1} parent=5 // pred_check_branch
        %3091 = sbr.rel (%p3089) target = $region56
      $region55: #{tpu_custom_call.1} parent=5 // pred_region
        %s3092 = ssub.s32 %s16, 2
        // Predicated region
        $region57: #{tpu_custom_call.1} parent=55 // pred_check
          %p3093 = pneg %p197
        $region58: #{tpu_custom_call.1} parent=55 // pred_check_branch
          %3095 = sbr.rel (%p3093) target = $region60
        $region59: #{tpu_custom_call.1} parent=55 // pred_region
          %s3096 = sand.u32 %s182, 1
          %s3097 = scalar_lea.sflag [#allocation3], %s3096
          %s3098 = sand.u32 %s182, 1
          %s3099 = smul.addr %s3098, 256
          %s3100 = scalar_lea.vmem [#allocation2], %s3099
          %3101 = dma.done %s3097, 4096
        $region60: #{tpu_custom_call.1} parent=55 // pred_fallthru
          _
      $region56: #{tpu_custom_call.1} parent=5 // pred_fallthru
        _
    $region6: #{tpu_custom_call.1} parent=1 // loop_footer
      %s20 = sadd.s32 1, %s16
    $region7: #{tpu_custom_call.1} parent=1 // loop_footer_branch
      %15 = sbr.rel target = $region3
    $region8: #{tpu_custom_call.1} parent=1 // loop_exit
      _
    %3102 = vsyncpa [#allocation3], 1
    %s3103 = scalar_lea.sflag [#allocation3], 1
    %3104 = vsyncpa %s3103, 1

</llo_original>
